<compile_context>
chip_gen: v6e
topology: v6e:2x2x1
jax: 0.10.0
libtpu: 0.0.40
codegen_flags: <defaults>
</compile_context>

<pallas_src>
import numpy as np
import jax
import jax.numpy as jnp
from jax.experimental import pallas as pl
from jax.experimental.pallas import tpu as pltpu


# ----------------------------------------------------------------------------
# Pass 1 kernel: MLPs + classifiers + tcam fusion, one (batch, time-tile) step.
# ----------------------------------------------------------------------------
def _mlp_tcam_kernel(
    inf_f_ref, inf_r_ref,            # (1, tt, F2) feature-half windows of `inputs`
    wf_ref, bf_ref,                  # fc_f:          bf16 (F2,F2), f32 (1,F2)
    w1f_ref, b1f_ref,                # fc1_f
    wcf_ref, bcf_ref,                # classifier_f:  bf16 (F2,Cp), f32 (1,Cp)
    wr_ref, br_ref,                  # fc_r
    w1r_ref, b1r_ref,                # fc1_r
    wcr_ref, bcr_ref,                # classifier_r
    mulf_ref, mulr_ref,              # f32 (1, Cp)
    xf_out, clsf_out, xr_out, clsr_out, tcam_out,
):
    def branch(in_ref, w, bias, w1, bias1, wc, bc, x_out, cls_out):
        # bf16 MXU operands, f32 accumulation; elementwise epilogue in f32.
        base = in_ref[0].astype(jnp.bfloat16)                         # (tt, F2)
        h = jnp.maximum(
            jnp.dot(base, w[...], preferred_element_type=jnp.float32)
            + bias[...], 0.0)
        x = jnp.maximum(
            jnp.dot(h.astype(jnp.bfloat16), w1[...],
                    preferred_element_type=jnp.float32)
            + bias1[...], 0.0)                                        # (tt, F2) f32
        x_out[0] = x.astype(x_out.dtype)     # early writeback -> short live range
        cls = (jnp.dot(x.astype(jnp.bfloat16), wc[...],
                       preferred_element_type=jnp.float32) + bc[...])  # (tt, Cp)
        cls_out[0] = cls
        return cls

    # Finish branch "f" completely (compute + store) before starting "r".
    cls_f = branch(inf_f_ref, wf_ref, bf_ref, w1f_ref, b1f_ref,
                   wcf_ref, bcf_ref, xf_out, clsf_out)
    cls_r = branch(inf_r_ref, wr_ref, br_ref, w1r_ref, b1r_ref,
                   wcr_ref, bcr_ref, xr_out, clsr_out)

    # tcam fusion (padded class columns are identically zero).
    tcam_out[0] = cls_r * mulr_ref[...] + cls_f * mulf_ref[...]
    # TODO(synk): n_class == 100 grouped dilated Conv1d refinement of tcam is
    # not exercised by this configuration and is not ported.
    # TODO(synk): dropout (training-only path) is not ported; forward here is
    # inference (is_training=False), matching the reference defaults.


# ----------------------------------------------------------------------------
# Pass 2 kernel: masked softmax over time + count_feat, one batch per step.
# ----------------------------------------------------------------------------
def _atn_count_kernel(lens_ref, tcam_ref, count_out):
    b = pl.program_id(0)
    tcam = tcam_ref[0]                                   # (T_pad, Cp) f32
    T, Cp = tcam.shape
    L = jnp.clip(lens_ref[b], 0, T)                      # already host-clamped to orig T
    t_idx = jax.lax.broadcasted_iota(jnp.int32, (T, Cp), 0)
    mask = t_idx < L
    m = jnp.max(jnp.where(mask, tcam, -jnp.inf), axis=0, keepdims=True)
    m = jnp.where(L > 0, m, jnp.zeros_like(m))           # guard seq_len == 0 (all masked)
    e = jnp.where(mask, jnp.exp(tcam - m), 0.0)
    s = jnp.maximum(jnp.sum(e, axis=0, keepdims=True), jnp.float32(1e-30))
    sm = e * pl.reciprocal(s, approx=True)               # EUP vrcp, free slot
    atn = jnp.where(mask, sm, tcam)                      # tail positions pass through raw
    count_out[0] = tcam * atn                            # labels101to20 is None


# ----------------------------------------------------------------------------
# Wrapper helpers
# ----------------------------------------------------------------------------
def _round_up(x, m):
    return (x + m - 1) // m * m


def _pad_last(x, to):
    pad = to - x.shape[-1]
    if pad == 0:
        return x
    return jnp.pad(x, [(0, 0)] * (x.ndim - 1) + [(0, pad)])


def _vmem_capacity_bytes():
    try:
        info = pltpu.get_tpu_info()
        cap = getattr(info, "vmem_capacity_bytes", None)
        if cap:
            return int(cap)
    except Exception:
        pass
    return 64 << 20                       # conservative (v7x per-TensorCore)


def _pass1_vmem_estimate(tt, F2, Cp, x_itemsize):
    b16, f32 = 2, 4
    weights = 4 * F2 * F2 * b16 + 2 * F2 * Cp * b16 + (4 * F2 + 4 * Cp) * f32
    in_tiles = 2 * (tt * F2 * f32) * 2                        # two halves, double-buffered
    out_tiles = (2 * tt * F2 * x_itemsize + 3 * tt * Cp * f32) * 2
    temps = 3 * tt * F2 * f32 + 2 * tt * F2 * b16 + 4 * tt * Cp * f32
    return weights + in_tiles + out_tiles + temps


def _vmem_limit(estimate_bytes):
    cap = int(_vmem_capacity_bytes() * 0.85)   # generation-aware cap with headroom
    want = int(estimate_bytes * 1.25) + (4 << 20)
    return max(min(want, cap), min(32 << 20, cap))


def prepare_params(params):
    """One-time bf16 cast / class-dim padding of the weights.

    Call once and cache the result: doing this per forward call costs ~24 MiB
    of pure HBM re-cast traffic at production shapes.
    """
    C = params["wc_f"].shape[1]
    Cp = _round_up(C, 128)
    bf16 = jnp.bfloat16
    return {
        "w_f":  jnp.asarray(params["w_f"], bf16),  "b_f":  jnp.asarray(params["b_f"]),
        "w1_f": jnp.asarray(params["w1_f"], bf16), "b1_f": jnp.asarray(params["b1_f"]),
        "wc_f": _pad_last(params["wc_f"], Cp).astype(bf16),
        "bc_f": _pad_last(params["bc_f"], Cp),
        "w_r":  jnp.asarray(params["w_r"], bf16),  "b_r":  jnp.asarray(params["b_r"]),
        "w1_r": jnp.asarray(params["w1_r"], bf16), "b1_r": jnp.asarray(params["b1_r"]),
        "wc_r": _pad_last(params["wc_r"], Cp).astype(bf16),
        "bc_r": _pad_last(params["bc_r"], Cp),
        "mul_f": _pad_last(params["mul_f"], Cp),
        "mul_r": _pad_last(params["mul_r"], Cp),
    }


# ----------------------------------------------------------------------------
# Forward
# ----------------------------------------------------------------------------
def three_c_net_forward(inputs, prepared, seq_len, n_class, *,
                        time_tile=256, x_dtype=jnp.bfloat16,
                        strip_class_pad=True):
    """inputs: f32[B, T, 2*F2]; prepared: output of prepare_params; seq_len: int[B]."""
    B, T, nfeat = inputs.shape
    F2 = nfeat // 2
    assert F2 % 128 == 0, "feature half must be lane-aligned (multiple of 128)"
    Cp = prepared["wc_f"].shape[1]
    C = n_class

    # Time tiling: tile is 16-aligned (safe for packed bf16 outputs), T padded
    # to a multiple of the tile so every store is dense.
    tt = min(_round_up(T, 16), _round_up(time_tile, 16))
    T_pad = _round_up(T, tt)
    x_pad = inputs if T_pad == T else jnp.pad(inputs, ((0, 0), (0, T_pad - T), (0, 0)))
    nT = T_pad // tt

    # Grid-invariant operands: single-buffered (no wasted second VMEM buffer).
    const = lambda shp: pl.BlockSpec(shp, lambda b, t: (0,) * len(shp),
                                     pipeline_mode=pl.Buffered(1))
    per_tile = lambda last: pl.BlockSpec((1, tt, last), lambda b, t: (b, t, 0))

    grid_spec1 = pltpu.PrefetchScalarGridSpec(
        num_scalar_prefetch=0,
        grid=(B, nT),
        in_specs=[
            # Feature-half windows selected directly by the BlockSpec DMA:
            # block 1 along the last dim == inputs[:, :, F2:] ("f" stream),
            # block 0 == inputs[:, :, :F2] ("r" stream).
            pl.BlockSpec((1, tt, F2), lambda b, t: (b, t, 1)),
            pl.BlockSpec((1, tt, F2), lambda b, t: (b, t, 0)),
            const((F2, F2)), const((1, F2)),       # fc_f
            const((F2, F2)), const((1, F2)),       # fc1_f
            const((F2, Cp)), const((1, Cp)),       # classifier_f
            const((F2, F2)), const((1, F2)),       # fc_r
            const((F2, F2)), const((1, F2)),       # fc1_r
            const((F2, Cp)), const((1, Cp)),       # classifier_r
            const((1, Cp)), const((1, Cp)),        # mul_f, mul_r
        ],
        out_specs=[per_tile(F2), per_tile(Cp),     # x_f, cls_x_f
                   per_tile(F2), per_tile(Cp),     # x_r, cls_x_r
                   per_tile(Cp)],                  # tcam
    )

    out_shapes1 = (
        jax.ShapeDtypeStruct((B, T_pad, F2), x_dtype),
        jax.ShapeDtypeStruct((B, T_pad, Cp), jnp.float32),
        jax.ShapeDtypeStruct((B, T_pad, F2), x_dtype),
        jax.ShapeDtypeStruct((B, T_pad, Cp), jnp.float32),
        jax.ShapeDtypeStruct((B, T_pad, Cp), jnp.float32),
    )

    x_f, cls_f, x_r, cls_r, tcam = pl.pallas_call(
        _mlp_tcam_kernel,
        out_shape=out_shapes1,
        grid_spec=grid_spec1,
        compiler_params=pltpu.CompilerParams(
            dimension_semantics=("parallel", "parallel"),
            vmem_limit_bytes=_vmem_limit(
                _pass1_vmem_estimate(tt, F2, Cp, jnp.dtype(x_dtype).itemsize))),
    )(
        x_pad, x_pad,
        prepared["w_f"], prepared["b_f"], prepared["w1_f"], prepared["b1_f"],
        prepared["wc_f"], prepared["bc_f"],
        prepared["w_r"], prepared["b_r"], prepared["w1_r"], prepared["b1_r"],
        prepared["wc_r"], prepared["bc_r"],
        prepared["mul_f"], prepared["mul_r"],
    )

    # Pass 2: per-batch masked softmax over (full) time + count_feat.
    lens = jnp.clip(seq_len.astype(jnp.int32), 0, T)       # clamp to ORIGINAL T
    grid_spec2 = pltpu.PrefetchScalarGridSpec(
        num_scalar_prefetch=1,
        grid=(B,),
        in_specs=[pl.BlockSpec((1, T_pad, Cp), lambda b, lens: (b, 0, 0))],
        out_specs=pl.BlockSpec((1, T_pad, Cp), lambda b, lens: (b, 0, 0)),
    )
    count = pl.pallas_call(
        _atn_count_kernel,
        out_shape=jax.ShapeDtypeStruct((B, T_pad, Cp), jnp.float32),
        grid_spec=grid_spec2,
        compiler_params=pltpu.CompilerParams(dimension_semantics=("parallel",)),
    )(lens, tcam)

    def crop(a, last=None):
        if T_pad != T:
            a = a[:, :T]
        if last is not None and strip_class_pad:
            a = a[..., :last]
        return a

    # NOTE: with strip_class_pad=False (and T already tile-aligned) the
    # returns are the padded, lane-dense tensors and no extra XLA copies are
    # issued after the kernels.
    return (crop(x_f), crop(cls_f, C), crop(x_r), crop(cls_r, C),
            crop(tcam, C), crop(count, C))


# ----------------------------------------------------------------------------
# Deterministic parameter init (xavier_uniform, zero bias, mul = 1)
# ----------------------------------------------------------------------------
def _xavier(key, fan_in, fan_out):
    bound = np.sqrt(6.0 / (fan_in + fan_out))
    # Stored already transposed to [in, out] so the kernel does x @ W.
    return jax.random.uniform(key, (fan_in, fan_out), jnp.float32, -bound, bound)


def init_params(key, n_featureby2, n_class):
    keys = jax.random.split(key, 6)
    F2, C = n_featureby2, n_class
    return {
        "w_f":  _xavier(keys[0], F2, F2), "b_f":  jnp.zeros((1, F2), jnp.float32),
        "w1_f": _xavier(keys[1], F2, F2), "b1_f": jnp.zeros((1, F2), jnp.float32),
        "wc_f": _xavier(keys[2], F2, C),  "bc_f": jnp.zeros((1, C), jnp.float32),
        "w_r":  _xavier(keys[3], F2, F2), "b_r":  jnp.zeros((1, F2), jnp.float32),
        "w1_r": _xavier(keys[4], F2, F2), "b1_r": jnp.zeros((1, F2), jnp.float32),
        "wc_r": _xavier(keys[5], F2, C),  "bc_r": jnp.zeros((1, C), jnp.float32),
        "mul_f": jnp.ones((1, C), jnp.float32),
        "mul_r": jnp.ones((1, C), jnp.float32),
    }


# ----------------------------------------------------------------------------
# Pure-JAX reference (mirrors the PyTorch forward; matmul operands in bf16 to
# match the kernel's MXU precision, everything else f32).
# ----------------------------------------------------------------------------
def reference_forward(inputs, params, seq_len):
    B, T, nfeat = inputs.shape
    F2 = nfeat // 2
    relu = lambda z: jnp.maximum(z, 0.0)
    mm = lambda a, w: jnp.dot(a.astype(jnp.bfloat16), w.astype(jnp.bfloat16),
                              preferred_element_type=jnp.float32)
    bf, br = inputs[:, :, F2:], inputs[:, :, :F2]
    x_f = relu(mm(relu(mm(bf, params["w_f"]) + params["b_f"]),
                  params["w1_f"]) + params["b1_f"])
    x_r = relu(mm(relu(mm(br, params["w_r"]) + params["b_r"]),
                  params["w1_r"]) + params["b1_r"])
    cls_f = mm(x_f, params["wc_f"]) + params["bc_f"]
    cls_r = mm(x_r, params["wc_r"]) + params["bc_r"]
    tcam = cls_r * params["mul_r"] + cls_f * params["mul_f"]
    atns = []
    for b in range(B):
        L = int(min(int(seq_len[b]), T))
        head = jax.nn.softmax(tcam[b, :L], axis=0)
        atns.append(jnp.concatenate([head, tcam[b, L:]], axis=0))
    atn = jnp.stack(atns, axis=0)
    return x_f, cls_f, x_r, cls_r, tcam, tcam * atn


# ----------------------------------------------------------------------------
if __name__ == "__main__":
    # Small, lane-aligned shapes: n_feature = 2 * F2 = 256, T = 8, C = 16.
    B, T, F2, C = 2, 8, 128, 16
    key = jax.random.PRNGKey(0)
    k_in, k_par = jax.random.split(key)

    inputs = jax.random.normal(k_in, (B, T, 2 * F2), jnp.float32)
    params = init_params(k_par, F2, C)
    prepared = prepare_params(params)    # one-time cast/pad; cache in real use

    # First B entries of the hardcoded seq_len array in the PyTorch forward.
    full_seq_len = np.array([138, 391, 286, 206, 102, 750, 385, 193, 198, 325,
                             318, 347, 280, 700, 228, 202, 147, 254, 283, 185,
                             219, 321, 310, 583, 62, 226, 175, 750, 316, 255,
                             89, 51], dtype=np.int32)
    seq_len = jnp.asarray(full_seq_len[:B])

    outs = three_c_net_forward(inputs, prepared, seq_len, C)
    outs = jax.block_until_ready(outs)

    refs = reference_forward(inputs, params, seq_len)
    for o, r in zip(outs, refs):
        np.testing.assert_allclose(np.asarray(jnp.asarray(o, jnp.float32)),
                                   np.asarray(r), rtol=1e-2, atol=1e-2)

    print("KERNEL_OK")
</pallas_src>

<mosaic_0001>
module attributes {stable_mosaic.version = 11 : i64} {
  func.func @_mlp_tcam_kernel(%arg0: i32, %arg1: i32, %arg2: memref<1x16x128xf32, #tpu.memory_space<vmem>>, %arg3: memref<1x16x128xf32, #tpu.memory_space<vmem>>, %arg4: memref<128x128xbf16, #tpu.memory_space<vmem>>, %arg5: memref<1x128xf32, #tpu.memory_space<vmem>>, %arg6: memref<128x128xbf16, #tpu.memory_space<vmem>>, %arg7: memref<1x128xf32, #tpu.memory_space<vmem>>, %arg8: memref<128x128xbf16, #tpu.memory_space<vmem>>, %arg9: memref<1x128xf32, #tpu.memory_space<vmem>>, %arg10: memref<128x128xbf16, #tpu.memory_space<vmem>>, %arg11: memref<1x128xf32, #tpu.memory_space<vmem>>, %arg12: memref<128x128xbf16, #tpu.memory_space<vmem>>, %arg13: memref<1x128xf32, #tpu.memory_space<vmem>>, %arg14: memref<128x128xbf16, #tpu.memory_space<vmem>>, %arg15: memref<1x128xf32, #tpu.memory_space<vmem>>, %arg16: memref<1x128xf32, #tpu.memory_space<vmem>>, %arg17: memref<1x128xf32, #tpu.memory_space<vmem>>, %arg18: memref<1x16x128xbf16, #tpu.memory_space<vmem>>, %arg19: memref<1x16x128xf32, #tpu.memory_space<vmem>>, %arg20: memref<1x16x128xbf16, #tpu.memory_space<vmem>>, %arg21: memref<1x16x128xf32, #tpu.memory_space<vmem>>, %arg22: memref<1x16x128xf32, #tpu.memory_space<vmem>>) attributes {dimension_semantics = [#tpu.dimension_semantics<parallel>, #tpu.dimension_semantics<parallel>], iteration_bounds = array<i64: 2, 1>, scalar_prefetch = 0 : i64, scratch_operands = 0 : i64, tpu.core_type = #tpu.core_type<tc>, window_params = [{transform_indices = @transform_0, window_bounds = array<i64: 1, 16, 128>}, {transform_indices = @transform_1, window_bounds = array<i64: 1, 16, 128>}, {pipeline_mode = #tpu.pipeline_mode<synchronous>, transform_indices = @transform_2, window_bounds = array<i64: 128, 128>}, {pipeline_mode = #tpu.pipeline_mode<synchronous>, transform_indices = @transform_3, window_bounds = array<i64: 1, 128>}, {pipeline_mode = #tpu.pipeline_mode<synchronous>, transform_indices = @transform_4, window_bounds = array<i64: 128, 128>}, {pipeline_mode = #tpu.pipeline_mode<synchronous>, transform_indices = @transform_5, window_bounds = array<i64: 1, 128>}, {pipeline_mode = #tpu.pipeline_mode<synchronous>, transform_indices = @transform_6, window_bounds = array<i64: 128, 128>}, {pipeline_mode = #tpu.pipeline_mode<synchronous>, transform_indices = @transform_7, window_bounds = array<i64: 1, 128>}, {pipeline_mode = #tpu.pipeline_mode<synchronous>, transform_indices = @transform_8, window_bounds = array<i64: 128, 128>}, {pipeline_mode = #tpu.pipeline_mode<synchronous>, transform_indices = @transform_9, window_bounds = array<i64: 1, 128>}, {pipeline_mode = #tpu.pipeline_mode<synchronous>, transform_indices = @transform_10, window_bounds = array<i64: 128, 128>}, {pipeline_mode = #tpu.pipeline_mode<synchronous>, transform_indices = @transform_11, window_bounds = array<i64: 1, 128>}, {pipeline_mode = #tpu.pipeline_mode<synchronous>, transform_indices = @transform_12, window_bounds = array<i64: 128, 128>}, {pipeline_mode = #tpu.pipeline_mode<synchronous>, transform_indices = @transform_13, window_bounds = array<i64: 1, 128>}, {pipeline_mode = #tpu.pipeline_mode<synchronous>, transform_indices = @transform_14, window_bounds = array<i64: 1, 128>}, {pipeline_mode = #tpu.pipeline_mode<synchronous>, transform_indices = @transform_15, window_bounds = array<i64: 1, 128>}, {transform_indices = @transform_16, window_bounds = array<i64: 1, 16, 128>}, {transform_indices = @transform_17, window_bounds = array<i64: 1, 16, 128>}, {transform_indices = @transform_18, window_bounds = array<i64: 1, 16, 128>}, {transform_indices = @transform_19, window_bounds = array<i64: 1, 16, 128>}, {transform_indices = @transform_20, window_bounds = array<i64: 1, 16, 128>}]} {
    %c0 = arith.constant 0 : index
    %c0_0 = arith.constant 0 : index
    %c0_1 = arith.constant 0 : index
    %0 = vector.load %arg2[%c0, %c0_0, %c0_1] : memref<1x16x128xf32, #tpu.memory_space<vmem>>, vector<1x16x128xf32>
    %1 = vector.shape_cast %0 : vector<1x16x128xf32> to vector<16x128xf32>
    %2 = arith.truncf %1 : vector<16x128xf32> to vector<16x128xbf16>
    %c0_2 = arith.constant 0 : index
    %c0_3 = arith.constant 0 : index
    %3 = vector.load %arg4[%c0_2, %c0_3] : memref<128x128xbf16, #tpu.memory_space<vmem>>, vector<128x128xbf16>
    %cst = arith.constant dense<0.000000e+00> : vector<16x128xf32>
    %4 = tpu.matmul %2, %3, %cst {dimension_numbers = #tpu.dot_dimension_numbers<[1], [0], [0], [1], [0, 0, 1, 1], [], []>} : vector<16x128xbf16>, vector<128x128xbf16>, vector<16x128xf32> -> vector<16x128xf32>
    %c0_4 = arith.constant 0 : index
    %c0_5 = arith.constant 0 : index
    %5 = vector.load %arg5[%c0_4, %c0_5] : memref<1x128xf32, #tpu.memory_space<vmem>>, vector<1x128xf32>
    %6 = vector.broadcast %5 : vector<1x128xf32> to vector<16x128xf32>
    %7 = arith.addf %4, %6 : vector<16x128xf32>
    %cst_6 = arith.constant 0.000000e+00 : f32
    %8 = vector.broadcast %cst_6 : f32 to vector<16x128xf32>
    %9 = arith.maximumf %7, %8 : vector<16x128xf32>
    %10 = arith.truncf %9 : vector<16x128xf32> to vector<16x128xbf16>
    %c0_7 = arith.constant 0 : index
    %c0_8 = arith.constant 0 : index
    %11 = vector.load %arg6[%c0_7, %c0_8] : memref<128x128xbf16, #tpu.memory_space<vmem>>, vector<128x128xbf16>
    %cst_9 = arith.constant dense<0.000000e+00> : vector<16x128xf32>
    %12 = tpu.matmul %10, %11, %cst_9 {dimension_numbers = #tpu.dot_dimension_numbers<[1], [0], [0], [1], [0, 0, 1, 1], [], []>} : vector<16x128xbf16>, vector<128x128xbf16>, vector<16x128xf32> -> vector<16x128xf32>
    %c0_10 = arith.constant 0 : index
    %c0_11 = arith.constant 0 : index
    %13 = vector.load %arg7[%c0_10, %c0_11] : memref<1x128xf32, #tpu.memory_space<vmem>>, vector<1x128xf32>
    %14 = vector.broadcast %13 : vector<1x128xf32> to vector<16x128xf32>
    %15 = arith.addf %12, %14 : vector<16x128xf32>
    %cst_12 = arith.constant 0.000000e+00 : f32
    %16 = vector.broadcast %cst_12 : f32 to vector<16x128xf32>
    %17 = arith.maximumf %15, %16 : vector<16x128xf32>
    %18 = arith.truncf %17 : vector<16x128xf32> to vector<16x128xbf16>
    %c0_13 = arith.constant 0 : index
    %c0_14 = arith.constant 0 : index
    %c0_15 = arith.constant 0 : index
    %19 = vector.load %arg18[%c0_13, %c0_14, %c0_15] : memref<1x16x128xbf16, #tpu.memory_space<vmem>>, vector<1x16x128xbf16>
    %20 = vector.shape_cast %19 : vector<1x16x128xbf16> to vector<16x128xbf16>
    %21 = vector.shape_cast %18 : vector<16x128xbf16> to vector<1x16x128xbf16>
    tpu.vector_store %arg18[%c0_13, %c0_14, %c0_15], %21 {strides = array<i32>} : memref<1x16x128xbf16, #tpu.memory_space<vmem>>, vector<1x16x128xbf16>,
    %22 = arith.truncf %17 : vector<16x128xf32> to vector<16x128xbf16>
    %c0_16 = arith.constant 0 : index
    %c0_17 = arith.constant 0 : index
    %23 = vector.load %arg8[%c0_16, %c0_17] : memref<128x128xbf16, #tpu.memory_space<vmem>>, vector<128x128xbf16>
    %cst_18 = arith.constant dense<0.000000e+00> : vector<16x128xf32>
    %24 = tpu.matmul %22, %23, %cst_18 {dimension_numbers = #tpu.dot_dimension_numbers<[1], [0], [0], [1], [0, 0, 1, 1], [], []>} : vector<16x128xbf16>, vector<128x128xbf16>, vector<16x128xf32> -> vector<16x128xf32>
    %c0_19 = arith.constant 0 : index
    %c0_20 = arith.constant 0 : index
    %25 = vector.load %arg9[%c0_19, %c0_20] : memref<1x128xf32, #tpu.memory_space<vmem>>, vector<1x128xf32>
    %26 = vector.broadcast %25 : vector<1x128xf32> to vector<16x128xf32>
    %27 = arith.addf %24, %26 : vector<16x128xf32>
    %c0_21 = arith.constant 0 : index
    %c0_22 = arith.constant 0 : index
    %c0_23 = arith.constant 0 : index
    %28 = vector.load %arg19[%c0_21, %c0_22, %c0_23] : memref<1x16x128xf32, #tpu.memory_space<vmem>>, vector<1x16x128xf32>
    %29 = vector.shape_cast %28 : vector<1x16x128xf32> to vector<16x128xf32>
    %30 = vector.shape_cast %27 : vector<16x128xf32> to vector<1x16x128xf32>
    tpu.vector_store %arg19[%c0_21, %c0_22, %c0_23], %30 {strides = array<i32>} : memref<1x16x128xf32, #tpu.memory_space<vmem>>, vector<1x16x128xf32>,
    %c0_24 = arith.constant 0 : index
    %c0_25 = arith.constant 0 : index
    %c0_26 = arith.constant 0 : index
    %31 = vector.load %arg3[%c0_24, %c0_25, %c0_26] : memref<1x16x128xf32, #tpu.memory_space<vmem>>, vector<1x16x128xf32>
    %32 = vector.shape_cast %31 : vector<1x16x128xf32> to vector<16x128xf32>
    %33 = arith.truncf %32 : vector<16x128xf32> to vector<16x128xbf16>
    %c0_27 = arith.constant 0 : index
    %c0_28 = arith.constant 0 : index
    %34 = vector.load %arg10[%c0_27, %c0_28] : memref<128x128xbf16, #tpu.memory_space<vmem>>, vector<128x128xbf16>
    %cst_29 = arith.constant dense<0.000000e+00> : vector<16x128xf32>
    %35 = tpu.matmul %33, %34, %cst_29 {dimension_numbers = #tpu.dot_dimension_numbers<[1], [0], [0], [1], [0, 0, 1, 1], [], []>} : vector<16x128xbf16>, vector<128x128xbf16>, vector<16x128xf32> -> vector<16x128xf32>
    %c0_30 = arith.constant 0 : index
    %c0_31 = arith.constant 0 : index
    %36 = vector.load %arg11[%c0_30, %c0_31] : memref<1x128xf32, #tpu.memory_space<vmem>>, vector<1x128xf32>
    %37 = vector.broadcast %36 : vector<1x128xf32> to vector<16x128xf32>
    %38 = arith.addf %35, %37 : vector<16x128xf32>
    %cst_32 = arith.constant 0.000000e+00 : f32
    %39 = vector.broadcast %cst_32 : f32 to vector<16x128xf32>
    %40 = arith.maximumf %38, %39 : vector<16x128xf32>
    %41 = arith.truncf %40 : vector<16x128xf32> to vector<16x128xbf16>
    %c0_33 = arith.constant 0 : index
    %c0_34 = arith.constant 0 : index
    %42 = vector.load %arg12[%c0_33, %c0_34] : memref<128x128xbf16, #tpu.memory_space<vmem>>, vector<128x128xbf16>
    %cst_35 = arith.constant dense<0.000000e+00> : vector<16x128xf32>
    %43 = tpu.matmul %41, %42, %cst_35 {dimension_numbers = #tpu.dot_dimension_numbers<[1], [0], [0], [1], [0, 0, 1, 1], [], []>} : vector<16x128xbf16>, vector<128x128xbf16>, vector<16x128xf32> -> vector<16x128xf32>
    %c0_36 = arith.constant 0 : index
    %c0_37 = arith.constant 0 : index
    %44 = vector.load %arg13[%c0_36, %c0_37] : memref<1x128xf32, #tpu.memory_space<vmem>>, vector<1x128xf32>
    %45 = vector.broadcast %44 : vector<1x128xf32> to vector<16x128xf32>
    %46 = arith.addf %43, %45 : vector<16x128xf32>
    %cst_38 = arith.constant 0.000000e+00 : f32
    %47 = vector.broadcast %cst_38 : f32 to vector<16x128xf32>
    %48 = arith.maximumf %46, %47 : vector<16x128xf32>
    %49 = arith.truncf %48 : vector<16x128xf32> to vector<16x128xbf16>
    %c0_39 = arith.constant 0 : index
    %c0_40 = arith.constant 0 : index
    %c0_41 = arith.constant 0 : index
    %50 = vector.load %arg20[%c0_39, %c0_40, %c0_41] : memref<1x16x128xbf16, #tpu.memory_space<vmem>>, vector<1x16x128xbf16>
    %51 = vector.shape_cast %50 : vector<1x16x128xbf16> to vector<16x128xbf16>
    %52 = vector.shape_cast %49 : vector<16x128xbf16> to vector<1x16x128xbf16>
    tpu.vector_store %arg20[%c0_39, %c0_40, %c0_41], %52 {strides = array<i32>} : memref<1x16x128xbf16, #tpu.memory_space<vmem>>, vector<1x16x128xbf16>,
    %53 = arith.truncf %48 : vector<16x128xf32> to vector<16x128xbf16>
    %c0_42 = arith.constant 0 : index
    %c0_43 = arith.constant 0 : index
    %54 = vector.load %arg14[%c0_42, %c0_43] : memref<128x128xbf16, #tpu.memory_space<vmem>>, vector<128x128xbf16>
    %cst_44 = arith.constant dense<0.000000e+00> : vector<16x128xf32>
    %55 = tpu.matmul %53, %54, %cst_44 {dimension_numbers = #tpu.dot_dimension_numbers<[1], [0], [0], [1], [0, 0, 1, 1], [], []>} : vector<16x128xbf16>, vector<128x128xbf16>, vector<16x128xf32> -> vector<16x128xf32>
    %c0_45 = arith.constant 0 : index
    %c0_46 = arith.constant 0 : index
    %56 = vector.load %arg15[%c0_45, %c0_46] : memref<1x128xf32, #tpu.memory_space<vmem>>, vector<1x128xf32>
    %57 = vector.broadcast %56 : vector<1x128xf32> to vector<16x128xf32>
    %58 = arith.addf %55, %57 : vector<16x128xf32>
    %c0_47 = arith.constant 0 : index
    %c0_48 = arith.constant 0 : index
    %c0_49 = arith.constant 0 : index
    %59 = vector.load %arg21[%c0_47, %c0_48, %c0_49] : memref<1x16x128xf32, #tpu.memory_space<vmem>>, vector<1x16x128xf32>
    %60 = vector.shape_cast %59 : vector<1x16x128xf32> to vector<16x128xf32>
    %61 = vector.shape_cast %58 : vector<16x128xf32> to vector<1x16x128xf32>
    tpu.vector_store %arg21[%c0_47, %c0_48, %c0_49], %61 {strides = array<i32>} : memref<1x16x128xf32, #tpu.memory_space<vmem>>, vector<1x16x128xf32>,
    %c0_50 = arith.constant 0 : index
    %c0_51 = arith.constant 0 : index
    %62 = vector.load %arg17[%c0_50, %c0_51] : memref<1x128xf32, #tpu.memory_space<vmem>>, vector<1x128xf32>
    %63 = vector.broadcast %62 : vector<1x128xf32> to vector<16x128xf32>
    %64 = arith.mulf %58, %63 : vector<16x128xf32>
    %c0_52 = arith.constant 0 : index
    %c0_53 = arith.constant 0 : index
    %65 = vector.load %arg16[%c0_52, %c0_53] : memref<1x128xf32, #tpu.memory_space<vmem>>, vector<1x128xf32>
    %66 = vector.broadcast %65 : vector<1x128xf32> to vector<16x128xf32>
    %67 = arith.mulf %27, %66 : vector<16x128xf32>
    %68 = arith.addf %64, %67 : vector<16x128xf32>
    %c0_54 = arith.constant 0 : index
    %c0_55 = arith.constant 0 : index
    %c0_56 = arith.constant 0 : index
    %69 = vector.load %arg22[%c0_54, %c0_55, %c0_56] : memref<1x16x128xf32, #tpu.memory_space<vmem>>, vector<1x16x128xf32>
    %70 = vector.shape_cast %69 : vector<1x16x128xf32> to vector<16x128xf32>
    %71 = vector.shape_cast %68 : vector<16x128xf32> to vector<1x16x128xf32>
    tpu.vector_store %arg22[%c0_54, %c0_55, %c0_56], %71 {strides = array<i32>} : memref<1x16x128xf32, #tpu.memory_space<vmem>>, vector<1x16x128xf32>,
    return
  }
  func.func @transform_0(%arg0: i32, %arg1: i32) -> (i32, i32, i32) {
    %c1_i32 = arith.constant 1 : i32
    %c0_i32 = arith.constant 0 : i32
    return %arg0, %arg1, %c1_i32 : i32, i32, i32
  }
  func.func @transform_1(%arg0: i32, %arg1: i32) -> (i32, i32, i32) {
    %c0_i32 = arith.constant 0 : i32
    %c0_i32_0 = arith.constant 0 : i32
    return %arg0, %arg1, %c0_i32 : i32, i32, i32
  }
  func.func @transform_2(%arg0: i32, %arg1: i32) -> (i32, i32) {
    %c0_i32 = arith.constant 0 : i32
    %c0_i32_0 = arith.constant 0 : i32
    %c0_i32_1 = arith.constant 0 : i32
    return %c0_i32, %c0_i32_0 : i32, i32
  }
  func.func @transform_3(%arg0: i32, %arg1: i32) -> (i32, i32) {
    %c0_i32 = arith.constant 0 : i32
    %c0_i32_0 = arith.constant 0 : i32
    %c0_i32_1 = arith.constant 0 : i32
    return %c0_i32, %c0_i32_0 : i32, i32
  }
  func.func @transform_4(%arg0: i32, %arg1: i32) -> (i32, i32) {
    %c0_i32 = arith.constant 0 : i32
    %c0_i32_0 = arith.constant 0 : i32
    %c0_i32_1 = arith.constant 0 : i32
    return %c0_i32, %c0_i32_0 : i32, i32
  }
  func.func @transform_5(%arg0: i32, %arg1: i32) -> (i32, i32) {
    %c0_i32 = arith.constant 0 : i32
    %c0_i32_0 = arith.constant 0 : i32
    %c0_i32_1 = arith.constant 0 : i32
    return %c0_i32, %c0_i32_0 : i32, i32
  }
  func.func @transform_6(%arg0: i32, %arg1: i32) -> (i32, i32) {
    %c0_i32 = arith.constant 0 : i32
    %c0_i32_0 = arith.constant 0 : i32
    %c0_i32_1 = arith.constant 0 : i32
    return %c0_i32, %c0_i32_0 : i32, i32
  }
  func.func @transform_7(%arg0: i32, %arg1: i32) -> (i32, i32) {
    %c0_i32 = arith.constant 0 : i32
    %c0_i32_0 = arith.constant 0 : i32
    %c0_i32_1 = arith.constant 0 : i32
    return %c0_i32, %c0_i32_0 : i32, i32
  }
  func.func @transform_8(%arg0: i32, %arg1: i32) -> (i32, i32) {
    %c0_i32 = arith.constant 0 : i32
    %c0_i32_0 = arith.constant 0 : i32
    %c0_i32_1 = arith.constant 0 : i32
    return %c0_i32, %c0_i32_0 : i32, i32
  }
  func.func @transform_9(%arg0: i32, %arg1: i32) -> (i32, i32) {
    %c0_i32 = arith.constant 0 : i32
    %c0_i32_0 = arith.constant 0 : i32
    %c0_i32_1 = arith.constant 0 : i32
    return %c0_i32, %c0_i32_0 : i32, i32
  }
  func.func @transform_10(%arg0: i32, %arg1: i32) -> (i32, i32) {
    %c0_i32 = arith.constant 0 : i32
    %c0_i32_0 = arith.constant 0 : i32
    %c0_i32_1 = arith.constant 0 : i32
    return %c0_i32, %c0_i32_0 : i32, i32
  }
  func.func @transform_11(%arg0: i32, %arg1: i32) -> (i32, i32) {
    %c0_i32 = arith.constant 0 : i32
    %c0_i32_0 = arith.constant 0 : i32
    %c0_i32_1 = arith.constant 0 : i32
    return %c0_i32, %c0_i32_0 : i32, i32
  }
  func.func @transform_12(%arg0: i32, %arg1: i32) -> (i32, i32) {
    %c0_i32 = arith.constant 0 : i32
    %c0_i32_0 = arith.constant 0 : i32
    %c0_i32_1 = arith.constant 0 : i32
    return %c0_i32, %c0_i32_0 : i32, i32
  }
  func.func @transform_13(%arg0: i32, %arg1: i32) -> (i32, i32) {
    %c0_i32 = arith.constant 0 : i32
    %c0_i32_0 = arith.constant 0 : i32
    %c0_i32_1 = arith.constant 0 : i32
    return %c0_i32, %c0_i32_0 : i32, i32
  }
  func.func @transform_14(%arg0: i32, %arg1: i32) -> (i32, i32) {
    %c0_i32 = arith.constant 0 : i32
    %c0_i32_0 = arith.constant 0 : i32
    %c0_i32_1 = arith.constant 0 : i32
    return %c0_i32, %c0_i32_0 : i32, i32
  }
  func.func @transform_15(%arg0: i32, %arg1: i32) -> (i32, i32) {
    %c0_i32 = arith.constant 0 : i32
    %c0_i32_0 = arith.constant 0 : i32
    %c0_i32_1 = arith.constant 0 : i32
    return %c0_i32, %c0_i32_0 : i32, i32
  }
  func.func @transform_16(%arg0: i32, %arg1: i32) -> (i32, i32, i32) {
    %c0_i32 = arith.constant 0 : i32
    %c0_i32_0 = arith.constant 0 : i32
    return %arg0, %arg1, %c0_i32 : i32, i32, i32
  }
  func.func @transform_17(%arg0: i32, %arg1: i32) -> (i32, i32, i32) {
    %c0_i32 = arith.constant 0 : i32
    %c0_i32_0 = arith.constant 0 : i32
    return %arg0, %arg1, %c0_i32 : i32, i32, i32
  }
  func.func @transform_18(%arg0: i32, %arg1: i32) -> (i32, i32, i32) {
    %c0_i32 = arith.constant 0 : i32
    %c0_i32_0 = arith.constant 0 : i32
    return %arg0, %arg1, %c0_i32 : i32, i32, i32
  }
  func.func @transform_19(%arg0: i32, %arg1: i32) -> (i32, i32, i32) {
    %c0_i32 = arith.constant 0 : i32
    %c0_i32_0 = arith.constant 0 : i32
    return %arg0, %arg1, %c0_i32 : i32, i32, i32
  }
  func.func @transform_20(%arg0: i32, %arg1: i32) -> (i32, i32, i32) {
    %c0_i32 = arith.constant 0 : i32
    %c0_i32_0 = arith.constant 0 : i32
    return %arg0, %arg1, %c0_i32 : i32, i32, i32
  }
}

</mosaic_0001>

<llo_original>
// kernel: tpu_custom_call.1
$region0: #{tpu_custom_call.1}
  #allocation0 [shape = 'u32[]', space=smem, size = 0x4, offset = 0x4, fixed_abs, tag = 'smem constant byte address 0x4 - core index']
  #allocation1 [shape = 'u32[144,128]{1,0:T(1,128)}', space=vmem, size = 0x12000, scoped, tag = 'internal scratch']
  %s0 = inlined_call_operand.hbm [shape: f32[2,16,256], index: 0, kind: input, shape index: {}]
  %s1 = inlined_call_operand.hbm [shape: f32[2,16,256], index: 1, kind: input, shape index: {}]
  %s2 = inlined_call_operand.hbm [shape: bf16[128,128], index: 2, kind: input, shape index: {}]
  %s3 = inlined_call_operand.vmem [shape: f32[1,128], index: 3, kind: input, shape index: {}]
  %s4 = inlined_call_operand.hbm [shape: bf16[128,128], index: 4, kind: input, shape index: {}]
  %s5 = inlined_call_operand.vmem [shape: f32[1,128], index: 5, kind: input, shape index: {}]
  %s6 = inlined_call_operand.hbm [shape: bf16[128,128], index: 6, kind: input, shape index: {}]
  %s7 = inlined_call_operand.vmem [shape: f32[1,128], index: 7, kind: input, shape index: {}]
  %s8 = inlined_call_operand.hbm [shape: bf16[128,128], index: 8, kind: input, shape index: {}]
  %s9 = inlined_call_operand.vmem [shape: f32[1,128], index: 9, kind: input, shape index: {}]
  %s10 = inlined_call_operand.hbm [shape: bf16[128,128], index: 10, kind: input, shape index: {}]
  %s11 = inlined_call_operand.vmem [shape: f32[1,128], index: 11, kind: input, shape index: {}]
  %s12 = inlined_call_operand.hbm [shape: bf16[128,128], index: 12, kind: input, shape index: {}]
  %s13 = inlined_call_operand.vmem [shape: f32[1,128], index: 13, kind: input, shape index: {}]
  %s14 = inlined_call_operand.vmem [shape: f32[1,128], index: 14, kind: input, shape index: {}]
  %s15 = inlined_call_operand.vmem [shape: f32[1,128], index: 15, kind: input, shape index: {}]
  %s16 = inlined_call_operand.hbm [shape: bf16[2,16,128], index: 16, kind: output, shape index: {0}]
  %s17 = inlined_call_operand.hbm [shape: f32[2,16,128], index: 17, kind: output, shape index: {1}]
  %s18 = inlined_call_operand.hbm [shape: bf16[2,16,128], index: 18, kind: output, shape index: {2}]
  %s19 = inlined_call_operand.hbm [shape: f32[2,16,128], index: 19, kind: output, shape index: {3}]
  %s20 = inlined_call_operand.hbm [shape: f32[2,16,128], index: 20, kind: output, shape index: {4}]
  %21 = xla_tuple %s16, %s17, %s18, %s19, %s20
  %s22 = sld [smem:[#allocation0]]
  $region161: #{tpu_custom_call.1} parent=0
    _
  %s24 = ssub.s32 1, %s22
  %s25 = scalar_select 0, %s24, %s22
  $region1: #{tpu_custom_call.1} parent=0
    #allocation2 [shape = 'u8[16384]{0}', space=vmem, size = 0x4000, scoped, tag = 'input window, operand 0']
    #allocation3 [shape = 's32[2]{0}', space=sflag, size = 0x8, scoped, tag = 'scoped memory for tpu_custom_call.1']
    #allocation4 [shape = 's32[2]{0}', space=sflag, size = 0x8, scoped, tag = 'scoped memory for tpu_custom_call.1']
    #allocation5 [shape = 'u8[16384]{0}', space=vmem, size = 0x4000, scoped, tag = 'input window, operand 1']
    #allocation6 [shape = 's32[2]{0}', space=sflag, size = 0x8, scoped, tag = 'scoped memory for tpu_custom_call.1']
    #allocation7 [shape = 'u8[32768]{0}', space=vmem, size = 0x8000, scoped, tag = 'input window, operand 2, single buffered']
    #allocation8 [shape = 'u8[32768]{0}', space=vmem, size = 0x8000, scoped, tag = 'input window, operand 4, single buffered']
    #allocation9 [shape = 's32[1]{0}', space=sflag, size = 0x4, scoped, tag = 'scoped memory for tpu_custom_call.1']
    #allocation10 [shape = 'u8[32768]{0}', space=vmem, size = 0x8000, scoped, tag = 'input window, operand 6, single buffered']
    #allocation11 [shape = 'u8[32768]{0}', space=vmem, size = 0x8000, scoped, tag = 'input window, operand 8, single buffered']
    #allocation12 [shape = 's32[1]{0}', space=sflag, size = 0x4, scoped, tag = 'scoped memory for tpu_custom_call.1']
    #allocation13 [shape = 'u8[32768]{0}', space=vmem, size = 0x8000, scoped, tag = 'input window, operand 10, single buffered']
    #allocation14 [shape = 'u8[32768]{0}', space=vmem, size = 0x8000, scoped, tag = 'input window, operand 12, single buffered']
    #allocation15 [shape = 's32[1]{0}', space=sflag, size = 0x4, scoped, tag = 'scoped memory for tpu_custom_call.1']
    #allocation16 [shape = 'u8[8192]{0}', space=vmem, size = 0x2000, scoped, tag = 'output window, operand 0']
    #allocation17 [shape = 'u8[16384]{0}', space=vmem, size = 0x4000, scoped, tag = 'output window, operand 1']
    #allocation18 [shape = 's32[2]{0}', space=sflag, size = 0x8, scoped, tag = 'scoped memory for tpu_custom_call.1']
    #allocation19 [shape = 'u8[8192]{0}', space=vmem, size = 0x2000, scoped, tag = 'output window, operand 2']
    #allocation20 [shape = 'u8[16384]{0}', space=vmem, size = 0x4000, scoped, tag = 'output window, operand 3']
    #allocation21 [shape = 's32[2]{0}', space=sflag, size = 0x8, scoped, tag = 'scoped memory for tpu_custom_call.1']
    #allocation22 [shape = 'u8[16384]{0}', space=vmem, size = 0x4000, scoped, tag = 'output window, operand 4']
    %26 = vsyncpa [#allocation3], 0
    %s27 = scalar_lea.sflag [#allocation3], 1
    %28 = vsyncpa %s27, 0
    %29 = vsyncpa [#allocation6], 0
    %s30 = scalar_lea.sflag [#allocation6], 1
    %31 = vsyncpa %s30, 0
    %32 = vsyncpa [#allocation9], 0
    %33 = vsyncpa [#allocation12], 0
    %34 = vsyncpa [#allocation15], 0
    %35 = vsyncpa [#allocation4], 0
    %s36 = scalar_lea.sflag [#allocation4], 1
    %37 = vsyncpa %s36, 0
    %38 = vsyncpa [#allocation18], 0
    %s39 = scalar_lea.sflag [#allocation18], 1
    %40 = vsyncpa %s39, 0
    %41 = vsyncpa [#allocation21], 0
    %s42 = scalar_lea.sflag [#allocation21], 1
    %43 = vsyncpa %s42, 0
    loop: start=0, step=1, limit=4
    $region2: #{tpu_custom_call.1} parent=1 // loop_pre_header
      _
    $region3: #{tpu_custom_call.1} parent=1 // loop_header
      %s45 = sphi 0, %s49
      %p46 = scmp.ge.s32.totalorder %s45, 4
      %s52 = sphi 0, %s64
      %s53 = sphi 0, %s60
      %s54 = sphi 0, %s52
      %s55 = sphi 0, %s53
      %s56 = sphi 0, %s54
      %s57 = sphi 0, %s55
      %s69 = sphi 0, %s71
      %s72 = sphi 0, %s69
      %s73 = sphi 0, %s72
      %s89 = sphi 0, %s73
      %s97 = sphi 0, %s99
      %s100 = sphi 0, %s97
      %s101 = sphi 0, %s100
      %s117 = sphi 0, %s101
      %s121 = sphi 0, %s121
      %s123 = sphi 0, %s121
      %s124 = sphi 0, %s123
      %s138 = sphi 0, %s124
      %s142 = sphi 0, %s142
      %s144 = sphi 0, %s142
      %s145 = sphi 0, %s144
      %s159 = sphi 0, %s145
      %s163 = sphi 0, %s163
      %s165 = sphi 0, %s163
      %s166 = sphi 0, %s165
      %s180 = sphi 0, %s166
      %s184 = sphi 0, %s184
      %s186 = sphi 0, %s184
      %s187 = sphi 0, %s186
      %s201 = sphi 0, %s187
      %s205 = sphi 0, %s205
      %s207 = sphi 0, %s205
      %s208 = sphi 0, %s207
      %s222 = sphi 0, %s208
      %s226 = sphi 0, %s226
      %s228 = sphi 0, %s226
      %s229 = sphi 0, %s228
      %s243 = sphi 0, %s229
      %s247 = sphi 0, %s247
      %s249 = sphi 0, %s247
      %s250 = sphi 0, %s249
      %s264 = sphi 0, %s250
      %s268 = sphi 0, %s268
      %s270 = sphi 0, %s268
      %s271 = sphi 0, %s270
      %s285 = sphi 0, %s271
      %s289 = sphi 0, %s289
      %s291 = sphi 0, %s289
      %s292 = sphi 0, %s291
      %s306 = sphi 0, %s292
      %s310 = sphi 0, %s310
      %s312 = sphi 0, %s310
      %s313 = sphi 0, %s312
      %s327 = sphi 0, %s313
      %s331 = sphi 0, %s331
      %s333 = sphi 0, %s331
      %s334 = sphi 0, %s333
      %s348 = sphi 0, %s334
      %s352 = sphi 0, %s352
      %s354 = sphi 0, %s352
      %s355 = sphi 0, %s354
      %s369 = sphi 0, %s355
      %s373 = sphi 0, %s373
      %s375 = sphi 0, %s373
      %s376 = sphi 0, %s375
      %s390 = sphi 0, %s376
      %s394 = sphi 0, %s394
      %s396 = sphi 0, %s394
      %s397 = sphi 0, %s396
      %s411 = sphi 0, %s397
      %s419 = sphi 0, %s421
      %s422 = sphi 0, %s419
      %s423 = sphi 0, %s422
      %s439 = sphi 0, %s423
      %s447 = sphi 0, %s449
      %s450 = sphi 0, %s447
      %s451 = sphi 0, %s450
      %s467 = sphi 0, %s451
      %s475 = sphi 0, %s477
      %s478 = sphi 0, %s475
      %s479 = sphi 0, %s478
      %s495 = sphi 0, %s479
      %s503 = sphi 0, %s505
      %s506 = sphi 0, %s503
      %s507 = sphi 0, %s506
      %s523 = sphi 0, %s507
      %s531 = sphi 0, %s533
      %s534 = sphi 0, %s531
      %s535 = sphi 0, %s534
      %s551 = sphi 0, %s535
    $region4: #{tpu_custom_call.1} parent=1 // loop_header_branch
      %48 = sbr.rel (%p46) target = $region8
    $region5: #{tpu_custom_call.1} parent=1 // loop_body
      %s50 = ssub.s32 %s45, 1
      %s51 = ssub.s32 %s45, 2
      %s58 = sadd.s32 1, %s53
      %p59 = scmp.ge.s32.totalorder %s58, 1
      %s60 = scalar_select %p59, 0, %s58
      %s61 = sadd.s32 1, %s52
      %s62 = scalar_select %p59, %s61, %s52
      %p63 = scmp.ge.s32.totalorder %s62, 2
      %s64 = scalar_select %p63, 0, %s62
      %s65 = ssub.s32 %s52, %s64
      %s66 = ssub.s32 %s53, %s60
      %s67 = sor.u32 %s65, %s66
      %p68 = scmp.eq.s32.totalorder %s67, 0
      %s70 = sadd.s32 %s69, 1
      %s71 = scalar_select %p68, %s69, %s70
      %p74 = pneg %p68
      %p75 = scmp.eq.s32.totalorder %s45, 1
      %p76 = por %p74, %p75
      %p77 = scmp.ne.s32.totalorder %s69, %s72
      %p78 = scmp.eq.s32.totalorder %s45, 0
      %p79 = por %p77, %p78
      %p80 = scmp.ne.s32.totalorder %s69, %s72
      %p81 = scmp.eq.s32.totalorder %s50, 1
      %p82 = por %p80, %p81
      %p83 = scmp.ne.s32.totalorder %s72, %s73
      %p84 = scmp.eq.s32.totalorder %s50, 0
      %p85 = por %p83, %p84
      %p86 = scmp.ne.s32.totalorder %s72, %s73
      %p87 = scmp.eq.s32.totalorder %s51, 1
      %p88 = por %p86, %p87
      %p90 = scmp.ne.s32.totalorder %s73, %s89
      %p91 = scmp.eq.s32.totalorder %s51, 0
      %p92 = por %p90, %p91
      %s93 = ssub.s32 %s52, %s64
      %s94 = ssub.s32 %s53, %s60
      %s95 = sor.u32 %s93, %s94
      %p96 = scmp.eq.s32.totalorder %s95, 0
      %s98 = sadd.s32 %s97, 1
      %s99 = scalar_select %p96, %s97, %s98
      %p102 = pneg %p96
      %p103 = scmp.eq.s32.totalorder %s45, 1
      %p104 = por %p102, %p103
      %p105 = scmp.ne.s32.totalorder %s97, %s100
      %p106 = scmp.eq.s32.totalorder %s45, 0
      %p107 = por %p105, %p106
      %p108 = scmp.ne.s32.totalorder %s97, %s100
      %p109 = scmp.eq.s32.totalorder %s50, 1
      %p110 = por %p108, %p109
      %p111 = scmp.ne.s32.totalorder %s100, %s101
      %p112 = scmp.eq.s32.totalorder %s50, 0
      %p113 = por %p111, %p112
      %p114 = scmp.ne.s32.totalorder %s100, %s101
      %p115 = scmp.eq.s32.totalorder %s51, 1
      %p116 = por %p114, %p115
      %p118 = scmp.ne.s32.totalorder %s101, %s117
      %p119 = scmp.eq.s32.totalorder %s51, 0
      %p120 = por %p118, %p119
      %s122 = sadd.s32 %s121, 1
      %p125 = scmp.eq.s32.totalorder %s45, 1
      %p126 = scmp.ne.s32.totalorder %s121, %s123
      %p127 = scmp.eq.s32.totalorder %s45, 0
      %p128 = por %p126, %p127
      %p129 = scmp.ne.s32.totalorder %s121, %s123
      %p130 = scmp.eq.s32.totalorder %s50, 1
      %p131 = por %p129, %p130
      %p132 = scmp.ne.s32.totalorder %s123, %s124
      %p133 = scmp.eq.s32.totalorder %s50, 0
      %p134 = por %p132, %p133
      %p135 = scmp.ne.s32.totalorder %s123, %s124
      %p136 = scmp.eq.s32.totalorder %s51, 1
      %p137 = por %p135, %p136
      %p139 = scmp.ne.s32.totalorder %s124, %s138
      %p140 = scmp.eq.s32.totalorder %s51, 0
      %p141 = por %p139, %p140
      %s143 = sadd.s32 %s142, 1
      %p146 = scmp.eq.s32.totalorder %s45, 1
      %p147 = scmp.ne.s32.totalorder %s142, %s144
      %p148 = scmp.eq.s32.totalorder %s45, 0
      %p149 = por %p147, %p148
      %p150 = scmp.ne.s32.totalorder %s142, %s144
      %p151 = scmp.eq.s32.totalorder %s50, 1
      %p152 = por %p150, %p151
      %p153 = scmp.ne.s32.totalorder %s144, %s145
      %p154 = scmp.eq.s32.totalorder %s50, 0
      %p155 = por %p153, %p154
      %p156 = scmp.ne.s32.totalorder %s144, %s145
      %p157 = scmp.eq.s32.totalorder %s51, 1
      %p158 = por %p156, %p157
      %p160 = scmp.ne.s32.totalorder %s145, %s159
      %p161 = scmp.eq.s32.totalorder %s51, 0
      %p162 = por %p160, %p161
      %s164 = sadd.s32 %s163, 1
      %p167 = scmp.eq.s32.totalorder %s45, 1
      %p168 = scmp.ne.s32.totalorder %s163, %s165
      %p169 = scmp.eq.s32.totalorder %s45, 0
      %p170 = por %p168, %p169
      %p171 = scmp.ne.s32.totalorder %s163, %s165
      %p172 = scmp.eq.s32.totalorder %s50, 1
      %p173 = por %p171, %p172
      %p174 = scmp.ne.s32.totalorder %s165, %s166
      %p175 = scmp.eq.s32.totalorder %s50, 0
      %p176 = por %p174, %p175
      %p177 = scmp.ne.s32.totalorder %s165, %s166
      %p178 = scmp.eq.s32.totalorder %s51, 1
      %p179 = por %p177, %p178
      %p181 = scmp.ne.s32.totalorder %s166, %s180
      %p182 = scmp.eq.s32.totalorder %s51, 0
      %p183 = por %p181, %p182
      %s185 = sadd.s32 %s184, 1
      %p188 = scmp.eq.s32.totalorder %s45, 1
      %p189 = scmp.ne.s32.totalorder %s184, %s186
      %p190 = scmp.eq.s32.totalorder %s45, 0
      %p191 = por %p189, %p190
      %p192 = scmp.ne.s32.totalorder %s184, %s186
      %p193 = scmp.eq.s32.totalorder %s50, 1
      %p194 = por %p192, %p193
      %p195 = scmp.ne.s32.totalorder %s186, %s187
      %p196 = scmp.eq.s32.totalorder %s50, 0
      %p197 = por %p195, %p196
      %p198 = scmp.ne.s32.totalorder %s186, %s187
      %p199 = scmp.eq.s32.totalorder %s51, 1
      %p200 = por %p198, %p199
      %p202 = scmp.ne.s32.totalorder %s187, %s201
      %p203 = scmp.eq.s32.totalorder %s51, 0
      %p204 = por %p202, %p203
      %s206 = sadd.s32 %s205, 1
      %p209 = scmp.eq.s32.totalorder %s45, 1
      %p210 = scmp.ne.s32.totalorder %s205, %s207
      %p211 = scmp.eq.s32.totalorder %s45, 0
      %p212 = por %p210, %p211
      %p213 = scmp.ne.s32.totalorder %s205, %s207
      %p214 = scmp.eq.s32.totalorder %s50, 1
      %p215 = por %p213, %p214
      %p216 = scmp.ne.s32.totalorder %s207, %s208
      %p217 = scmp.eq.s32.totalorder %s50, 0
      %p218 = por %p216, %p217
      %p219 = scmp.ne.s32.totalorder %s207, %s208
      %p220 = scmp.eq.s32.totalorder %s51, 1
      %p221 = por %p219, %p220
      %p223 = scmp.ne.s32.totalorder %s208, %s222
      %p224 = scmp.eq.s32.totalorder %s51, 0
      %p225 = por %p223, %p224
      %s227 = sadd.s32 %s226, 1
      %p230 = scmp.eq.s32.totalorder %s45, 1
      %p231 = scmp.ne.s32.totalorder %s226, %s228
      %p232 = scmp.eq.s32.totalorder %s45, 0
      %p233 = por %p231, %p232
      %p234 = scmp.ne.s32.totalorder %s226, %s228
      %p235 = scmp.eq.s32.totalorder %s50, 1
      %p236 = por %p234, %p235
      %p237 = scmp.ne.s32.totalorder %s228, %s229
      %p238 = scmp.eq.s32.totalorder %s50, 0
      %p239 = por %p237, %p238
      %p240 = scmp.ne.s32.totalorder %s228, %s229
      %p241 = scmp.eq.s32.totalorder %s51, 1
      %p242 = por %p240, %p241
      %p244 = scmp.ne.s32.totalorder %s229, %s243
      %p245 = scmp.eq.s32.totalorder %s51, 0
      %p246 = por %p244, %p245
      %s248 = sadd.s32 %s247, 1
      %p251 = scmp.eq.s32.totalorder %s45, 1
      %p252 = scmp.ne.s32.totalorder %s247, %s249
      %p253 = scmp.eq.s32.totalorder %s45, 0
      %p254 = por %p252, %p253
      %p255 = scmp.ne.s32.totalorder %s247, %s249
      %p256 = scmp.eq.s32.totalorder %s50, 1
      %p257 = por %p255, %p256
      %p258 = scmp.ne.s32.totalorder %s249, %s250
      %p259 = scmp.eq.s32.totalorder %s50, 0
      %p260 = por %p258, %p259
      %p261 = scmp.ne.s32.totalorder %s249, %s250
      %p262 = scmp.eq.s32.totalorder %s51, 1
      %p263 = por %p261, %p262
      %p265 = scmp.ne.s32.totalorder %s250, %s264
      %p266 = scmp.eq.s32.totalorder %s51, 0
      %p267 = por %p265, %p266
      %s269 = sadd.s32 %s268, 1
      %p272 = scmp.eq.s32.totalorder %s45, 1
      %p273 = scmp.ne.s32.totalorder %s268, %s270
      %p274 = scmp.eq.s32.totalorder %s45, 0
      %p275 = por %p273, %p274
      %p276 = scmp.ne.s32.totalorder %s268, %s270
      %p277 = scmp.eq.s32.totalorder %s50, 1
      %p278 = por %p276, %p277
      %p279 = scmp.ne.s32.totalorder %s270, %s271
      %p280 = scmp.eq.s32.totalorder %s50, 0
      %p281 = por %p279, %p280
      %p282 = scmp.ne.s32.totalorder %s270, %s271
      %p283 = scmp.eq.s32.totalorder %s51, 1
      %p284 = por %p282, %p283
      %p286 = scmp.ne.s32.totalorder %s271, %s285
      %p287 = scmp.eq.s32.totalorder %s51, 0
      %p288 = por %p286, %p287
      %s290 = sadd.s32 %s289, 1
      %p293 = scmp.eq.s32.totalorder %s45, 1
      %p294 = scmp.ne.s32.totalorder %s289, %s291
      %p295 = scmp.eq.s32.totalorder %s45, 0
      %p296 = por %p294, %p295
      %p297 = scmp.ne.s32.totalorder %s289, %s291
      %p298 = scmp.eq.s32.totalorder %s50, 1
      %p299 = por %p297, %p298
      %p300 = scmp.ne.s32.totalorder %s291, %s292
      %p301 = scmp.eq.s32.totalorder %s50, 0
      %p302 = por %p300, %p301
      %p303 = scmp.ne.s32.totalorder %s291, %s292
      %p304 = scmp.eq.s32.totalorder %s51, 1
      %p305 = por %p303, %p304
      %p307 = scmp.ne.s32.totalorder %s292, %s306
      %p308 = scmp.eq.s32.totalorder %s51, 0
      %p309 = por %p307, %p308
      %s311 = sadd.s32 %s310, 1
      %p314 = scmp.eq.s32.totalorder %s45, 1
      %p315 = scmp.ne.s32.totalorder %s310, %s312
      %p316 = scmp.eq.s32.totalorder %s45, 0
      %p317 = por %p315, %p316
      %p318 = scmp.ne.s32.totalorder %s310, %s312
      %p319 = scmp.eq.s32.totalorder %s50, 1
      %p320 = por %p318, %p319
      %p321 = scmp.ne.s32.totalorder %s312, %s313
      %p322 = scmp.eq.s32.totalorder %s50, 0
      %p323 = por %p321, %p322
      %p324 = scmp.ne.s32.totalorder %s312, %s313
      %p325 = scmp.eq.s32.totalorder %s51, 1
      %p326 = por %p324, %p325
      %p328 = scmp.ne.s32.totalorder %s313, %s327
      %p329 = scmp.eq.s32.totalorder %s51, 0
      %p330 = por %p328, %p329
      %s332 = sadd.s32 %s331, 1
      %p335 = scmp.eq.s32.totalorder %s45, 1
      %p336 = scmp.ne.s32.totalorder %s331, %s333
      %p337 = scmp.eq.s32.totalorder %s45, 0
      %p338 = por %p336, %p337
      %p339 = scmp.ne.s32.totalorder %s331, %s333
      %p340 = scmp.eq.s32.totalorder %s50, 1
      %p341 = por %p339, %p340
      %p342 = scmp.ne.s32.totalorder %s333, %s334
      %p343 = scmp.eq.s32.totalorder %s50, 0
      %p344 = por %p342, %p343
      %p345 = scmp.ne.s32.totalorder %s333, %s334
      %p346 = scmp.eq.s32.totalorder %s51, 1
      %p347 = por %p345, %p346
      %p349 = scmp.ne.s32.totalorder %s334, %s348
      %p350 = scmp.eq.s32.totalorder %s51, 0
      %p351 = por %p349, %p350
      %s353 = sadd.s32 %s352, 1
      %p356 = scmp.eq.s32.totalorder %s45, 1
      %p357 = scmp.ne.s32.totalorder %s352, %s354
      %p358 = scmp.eq.s32.totalorder %s45, 0
      %p359 = por %p357, %p358
      %p360 = scmp.ne.s32.totalorder %s352, %s354
      %p361 = scmp.eq.s32.totalorder %s50, 1
      %p362 = por %p360, %p361
      %p363 = scmp.ne.s32.totalorder %s354, %s355
      %p364 = scmp.eq.s32.totalorder %s50, 0
      %p365 = por %p363, %p364
      %p366 = scmp.ne.s32.totalorder %s354, %s355
      %p367 = scmp.eq.s32.totalorder %s51, 1
      %p368 = por %p366, %p367
      %p370 = scmp.ne.s32.totalorder %s355, %s369
      %p371 = scmp.eq.s32.totalorder %s51, 0
      %p372 = por %p370, %p371
      %s374 = sadd.s32 %s373, 1
      %p377 = scmp.eq.s32.totalorder %s45, 1
      %p378 = scmp.ne.s32.totalorder %s373, %s375
      %p379 = scmp.eq.s32.totalorder %s45, 0
      %p380 = por %p378, %p379
      %p381 = scmp.ne.s32.totalorder %s373, %s375
      %p382 = scmp.eq.s32.totalorder %s50, 1
      %p383 = por %p381, %p382
      %p384 = scmp.ne.s32.totalorder %s375, %s376
      %p385 = scmp.eq.s32.totalorder %s50, 0
      %p386 = por %p384, %p385
      %p387 = scmp.ne.s32.totalorder %s375, %s376
      %p388 = scmp.eq.s32.totalorder %s51, 1
      %p389 = por %p387, %p388
      %p391 = scmp.ne.s32.totalorder %s376, %s390
      %p392 = scmp.eq.s32.totalorder %s51, 0
      %p393 = por %p391, %p392
      %s395 = sadd.s32 %s394, 1
      %p398 = scmp.eq.s32.totalorder %s45, 1
      %p399 = scmp.ne.s32.totalorder %s394, %s396
      %p400 = scmp.eq.s32.totalorder %s45, 0
      %p401 = por %p399, %p400
      %p402 = scmp.ne.s32.totalorder %s394, %s396
      %p403 = scmp.eq.s32.totalorder %s50, 1
      %p404 = por %p402, %p403
      %p405 = scmp.ne.s32.totalorder %s396, %s397
      %p406 = scmp.eq.s32.totalorder %s50, 0
      %p407 = por %p405, %p406
      %p408 = scmp.ne.s32.totalorder %s396, %s397
      %p409 = scmp.eq.s32.totalorder %s51, 1
      %p410 = por %p408, %p409
      %p412 = scmp.ne.s32.totalorder %s397, %s411
      %p413 = scmp.eq.s32.totalorder %s51, 0
      %p414 = por %p412, %p413
      %s415 = ssub.s32 %s52, %s64
      %s416 = ssub.s32 %s53, %s60
      %s417 = sor.u32 %s415, %s416
      %p418 = scmp.eq.s32.totalorder %s417, 0
      %s420 = sadd.s32 %s419, 1
      %s421 = scalar_select %p418, %s419, %s420
      %p424 = pneg %p418
      %p425 = scmp.eq.s32.totalorder %s45, 1
      %p426 = por %p424, %p425
      %p427 = scmp.ne.s32.totalorder %s419, %s422
      %p428 = scmp.eq.s32.totalorder %s45, 0
      %p429 = por %p427, %p428
      %p430 = scmp.ne.s32.totalorder %s419, %s422
      %p431 = scmp.eq.s32.totalorder %s50, 1
      %p432 = por %p430, %p431
      %p433 = scmp.ne.s32.totalorder %s422, %s423
      %p434 = scmp.eq.s32.totalorder %s50, 0
      %p435 = por %p433, %p434
      %p436 = scmp.ne.s32.totalorder %s422, %s423
      %p437 = scmp.eq.s32.totalorder %s51, 1
      %p438 = por %p436, %p437
      %p440 = scmp.ne.s32.totalorder %s423, %s439
      %p441 = scmp.eq.s32.totalorder %s51, 0
      %p442 = por %p440, %p441
      %s443 = ssub.s32 %s52, %s64
      %s444 = ssub.s32 %s53, %s60
      %s445 = sor.u32 %s443, %s444
      %p446 = scmp.eq.s32.totalorder %s445, 0
      %s448 = sadd.s32 %s447, 1
      %s449 = scalar_select %p446, %s447, %s448
      %p452 = pneg %p446
      %p453 = scmp.eq.s32.totalorder %s45, 1
      %p454 = por %p452, %p453
      %p455 = scmp.ne.s32.totalorder %s447, %s450
      %p456 = scmp.eq.s32.totalorder %s45, 0
      %p457 = por %p455, %p456
      %p458 = scmp.ne.s32.totalorder %s447, %s450
      %p459 = scmp.eq.s32.totalorder %s50, 1
      %p460 = por %p458, %p459
      %p461 = scmp.ne.s32.totalorder %s450, %s451
      %p462 = scmp.eq.s32.totalorder %s50, 0
      %p463 = por %p461, %p462
      %p464 = scmp.ne.s32.totalorder %s450, %s451
      %p465 = scmp.eq.s32.totalorder %s51, 1
      %p466 = por %p464, %p465
      %p468 = scmp.ne.s32.totalorder %s451, %s467
      %p469 = scmp.eq.s32.totalorder %s51, 0
      %p470 = por %p468, %p469
      %s471 = ssub.s32 %s52, %s64
      %s472 = ssub.s32 %s53, %s60
      %s473 = sor.u32 %s471, %s472
      %p474 = scmp.eq.s32.totalorder %s473, 0
      %s476 = sadd.s32 %s475, 1
      %s477 = scalar_select %p474, %s475, %s476
      %p480 = pneg %p474
      %p481 = scmp.eq.s32.totalorder %s45, 1
      %p482 = por %p480, %p481
      %p483 = scmp.ne.s32.totalorder %s475, %s478
      %p484 = scmp.eq.s32.totalorder %s45, 0
      %p485 = por %p483, %p484
      %p486 = scmp.ne.s32.totalorder %s475, %s478
      %p487 = scmp.eq.s32.totalorder %s50, 1
      %p488 = por %p486, %p487
      %p489 = scmp.ne.s32.totalorder %s478, %s479
      %p490 = scmp.eq.s32.totalorder %s50, 0
      %p491 = por %p489, %p490
      %p492 = scmp.ne.s32.totalorder %s478, %s479
      %p493 = scmp.eq.s32.totalorder %s51, 1
      %p494 = por %p492, %p493
      %p496 = scmp.ne.s32.totalorder %s479, %s495
      %p497 = scmp.eq.s32.totalorder %s51, 0
      %p498 = por %p496, %p497
      %s499 = ssub.s32 %s52, %s64
      %s500 = ssub.s32 %s53, %s60
      %s501 = sor.u32 %s499, %s500
      %p502 = scmp.eq.s32.totalorder %s501, 0
      %s504 = sadd.s32 %s503, 1
      %s505 = scalar_select %p502, %s503, %s504
      %p508 = pneg %p502
      %p509 = scmp.eq.s32.totalorder %s45, 1
      %p510 = por %p508, %p509
      %p511 = scmp.ne.s32.totalorder %s503, %s506
      %p512 = scmp.eq.s32.totalorder %s45, 0
      %p513 = por %p511, %p512
      %p514 = scmp.ne.s32.totalorder %s503, %s506
      %p515 = scmp.eq.s32.totalorder %s50, 1
      %p516 = por %p514, %p515
      %p517 = scmp.ne.s32.totalorder %s506, %s507
      %p518 = scmp.eq.s32.totalorder %s50, 0
      %p519 = por %p517, %p518
      %p520 = scmp.ne.s32.totalorder %s506, %s507
      %p521 = scmp.eq.s32.totalorder %s51, 1
      %p522 = por %p520, %p521
      %p524 = scmp.ne.s32.totalorder %s507, %s523
      %p525 = scmp.eq.s32.totalorder %s51, 0
      %p526 = por %p524, %p525
      %s527 = ssub.s32 %s52, %s64
      %s528 = ssub.s32 %s53, %s60
      %s529 = sor.u32 %s527, %s528
      %p530 = scmp.eq.s32.totalorder %s529, 0
      %s532 = sadd.s32 %s531, 1
      %s533 = scalar_select %p530, %s531, %s532
      %p536 = pneg %p530
      %p537 = scmp.eq.s32.totalorder %s45, 1
      %p538 = por %p536, %p537
      %p539 = scmp.ne.s32.totalorder %s531, %s534
      %p540 = scmp.eq.s32.totalorder %s45, 0
      %p541 = por %p539, %p540
      %p542 = scmp.ne.s32.totalorder %s531, %s534
      %p543 = scmp.eq.s32.totalorder %s50, 1
      %p544 = por %p542, %p543
      %p545 = scmp.ne.s32.totalorder %s534, %s535
      %p546 = scmp.eq.s32.totalorder %s50, 0
      %p547 = por %p545, %p546
      %p548 = scmp.ne.s32.totalorder %s534, %s535
      %p549 = scmp.eq.s32.totalorder %s51, 1
      %p550 = por %p548, %p549
      %p552 = scmp.ne.s32.totalorder %s535, %s551
      %p553 = scmp.eq.s32.totalorder %s51, 0
      %p554 = por %p552, %p553
      %p555 = scmp.le.s32.totalorder 1, %s45
      %p556 = scmp.lt.s32.totalorder %s45, 3
      %p557 = pnand %p555, %p556
      %p558 = pneg %p557
      // Predicated region
      $region9: #{tpu_custom_call.1} parent=5 // pred_check
        _
      $region10: #{tpu_custom_call.1} parent=5 // pred_check_branch
        %560 = sbr.rel (%p557) target = $region12
      $region11: #{tpu_custom_call.1} parent=5 // pred_region
        %s561 = ssub.s32 %s45, 1
        // Predicated region
        $region13: #{tpu_custom_call.1} parent=11 // pred_check
          %p562 = pneg %p134
        $region14: #{tpu_custom_call.1} parent=11 // pred_check_branch
          %564 = sbr.rel (%p562) target = $region16
        $region15: #{tpu_custom_call.1} parent=11 // pred_region
          %s566 = ssub.s32 1024, 1024
          %567 = vsyncadd [#allocation6], %s566
          %s568 = sshll.u32 [#allocation7], 4
          %s569 = int_to_ptr.vmem [resolvable:$true] %s568
          %574 = dma.hbm_to_vmem [thread:$0]  %s2, 1024, %s569, [#allocation6], 64, 64, 4
        $region16: #{tpu_custom_call.1} parent=11 // pred_fallthru
          _
        // Predicated region
        $region17: #{tpu_custom_call.1} parent=11 // pred_check
          %p575 = pneg %p155
        $region18: #{tpu_custom_call.1} parent=11 // pred_check_branch
          %577 = sbr.rel (%p575) target = $region20
        $region19: #{tpu_custom_call.1} parent=11 // pred_region
          _
        $region20: #{tpu_custom_call.1} parent=11 // pred_fallthru
          _
        // Predicated region
        $region21: #{tpu_custom_call.1} parent=11 // pred_check
          %p578 = pneg %p176
        $region22: #{tpu_custom_call.1} parent=11 // pred_check_branch
          %580 = sbr.rel (%p578) target = $region24
        $region23: #{tpu_custom_call.1} parent=11 // pred_region
          %s582 = ssub.s32 1024, 1024
          %583 = vsyncadd [#allocation9], %s582
          %s584 = sshll.u32 [#allocation8], 4
          %s585 = int_to_ptr.vmem [resolvable:$true] %s584
          %590 = dma.hbm_to_vmem [thread:$0]  %s4, 1024, %s585, [#allocation9], 64, 64, 4
        $region24: #{tpu_custom_call.1} parent=11 // pred_fallthru
          _
        // Predicated region
        $region25: #{tpu_custom_call.1} parent=11 // pred_check
          %p591 = pneg %p197
        $region26: #{tpu_custom_call.1} parent=11 // pred_check_branch
          %593 = sbr.rel (%p591) target = $region28
        $region27: #{tpu_custom_call.1} parent=11 // pred_region
          _
        $region28: #{tpu_custom_call.1} parent=11 // pred_fallthru
          _
        // Predicated region
        $region29: #{tpu_custom_call.1} parent=11 // pred_check
          %p594 = pneg %p218
        $region30: #{tpu_custom_call.1} parent=11 // pred_check_branch
          %596 = sbr.rel (%p594) target = $region32
        $region31: #{tpu_custom_call.1} parent=11 // pred_region
          %s598 = ssub.s32 1024, 1024
          %599 = vsyncadd [#allocation9], %s598
          %s600 = sshll.u32 [#allocation10], 4
          %s601 = int_to_ptr.vmem [resolvable:$true] %s600
          %606 = dma.hbm_to_vmem [thread:$0]  %s6, 1024, %s601, [#allocation9], 64, 64, 4
        $region32: #{tpu_custom_call.1} parent=11 // pred_fallthru
          _
        // Predicated region
        $region33: #{tpu_custom_call.1} parent=11 // pred_check
          %p607 = pneg %p239
        $region34: #{tpu_custom_call.1} parent=11 // pred_check_branch
          %609 = sbr.rel (%p607) target = $region36
        $region35: #{tpu_custom_call.1} parent=11 // pred_region
          _
        $region36: #{tpu_custom_call.1} parent=11 // pred_fallthru
          _
        // Predicated region
        $region37: #{tpu_custom_call.1} parent=11 // pred_check
          %p610 = pneg %p260
        $region38: #{tpu_custom_call.1} parent=11 // pred_check_branch
          %612 = sbr.rel (%p610) target = $region40
        $region39: #{tpu_custom_call.1} parent=11 // pred_region
          %s614 = ssub.s32 1024, 1024
          %615 = vsyncadd [#allocation12], %s614
          %s616 = sshll.u32 [#allocation11], 4
          %s617 = int_to_ptr.vmem [resolvable:$true] %s616
          %622 = dma.hbm_to_vmem [thread:$0]  %s8, 1024, %s617, [#allocation12], 64, 64, 4
        $region40: #{tpu_custom_call.1} parent=11 // pred_fallthru
          _
        // Predicated region
        $region41: #{tpu_custom_call.1} parent=11 // pred_check
          %p623 = pneg %p281
        $region42: #{tpu_custom_call.1} parent=11 // pred_check_branch
          %625 = sbr.rel (%p623) target = $region44
        $region43: #{tpu_custom_call.1} parent=11 // pred_region
          _
        $region44: #{tpu_custom_call.1} parent=11 // pred_fallthru
          _
        // Predicated region
        $region45: #{tpu_custom_call.1} parent=11 // pred_check
          %p626 = pneg %p302
        $region46: #{tpu_custom_call.1} parent=11 // pred_check_branch
          %628 = sbr.rel (%p626) target = $region48
        $region47: #{tpu_custom_call.1} parent=11 // pred_region
          %s630 = ssub.s32 1024, 1024
          %631 = vsyncadd [#allocation12], %s630
          %s632 = sshll.u32 [#allocation13], 4
          %s633 = int_to_ptr.vmem [resolvable:$true] %s632
          %638 = dma.hbm_to_vmem [thread:$0]  %s10, 1024, %s633, [#allocation12], 64, 64, 4
        $region48: #{tpu_custom_call.1} parent=11 // pred_fallthru
          _
        // Predicated region
        $region49: #{tpu_custom_call.1} parent=11 // pred_check
          %p639 = pneg %p323
        $region50: #{tpu_custom_call.1} parent=11 // pred_check_branch
          %641 = sbr.rel (%p639) target = $region52
        $region51: #{tpu_custom_call.1} parent=11 // pred_region
          _
        $region52: #{tpu_custom_call.1} parent=11 // pred_fallthru
          _
        // Predicated region
        $region53: #{tpu_custom_call.1} parent=11 // pred_check
          %p642 = pneg %p344
        $region54: #{tpu_custom_call.1} parent=11 // pred_check_branch
          %644 = sbr.rel (%p642) target = $region56
        $region55: #{tpu_custom_call.1} parent=11 // pred_region
          %s646 = ssub.s32 1024, 1024
          %647 = vsyncadd [#allocation15], %s646
          %s648 = sshll.u32 [#allocation14], 4
          %s649 = int_to_ptr.vmem [resolvable:$true] %s648
          %654 = dma.hbm_to_vmem [thread:$0]  %s12, 1024, %s649, [#allocation15], 64, 64, 4
        $region56: #{tpu_custom_call.1} parent=11 // pred_fallthru
          _
        // Predicated region
        $region57: #{tpu_custom_call.1} parent=11 // pred_check
          %p655 = pneg %p365
        $region58: #{tpu_custom_call.1} parent=11 // pred_check_branch
          %657 = sbr.rel (%p655) target = $region60
        $region59: #{tpu_custom_call.1} parent=11 // pred_region
          _
        $region60: #{tpu_custom_call.1} parent=11 // pred_fallthru
          _
        // Predicated region
        $region61: #{tpu_custom_call.1} parent=11 // pred_check
          %p658 = pneg %p386
        $region62: #{tpu_custom_call.1} parent=11 // pred_check_branch
          %660 = sbr.rel (%p658) target = $region64
        $region63: #{tpu_custom_call.1} parent=11 // pred_region
          _
        $region64: #{tpu_custom_call.1} parent=11 // pred_fallthru
          _
        // Predicated region
        $region65: #{tpu_custom_call.1} parent=11 // pred_check
          %p661 = pneg %p407
        $region66: #{tpu_custom_call.1} parent=11 // pred_check_branch
          %663 = sbr.rel (%p661) target = $region68
        $region67: #{tpu_custom_call.1} parent=11 // pred_region
          _
        $region68: #{tpu_custom_call.1} parent=11 // pred_fallthru
          _
      $region12: #{tpu_custom_call.1} parent=5 // pred_fallthru
        _
      %p664 = scmp.lt.s32.totalorder %s45, 2
      // Predicated region
      $region69: #{tpu_custom_call.1} parent=5 // pred_check
        %p665 = pneg %p664
      $region70: #{tpu_custom_call.1} parent=5 // pred_check_branch
        %667 = sbr.rel (%p665) target = $region72
      $region71: #{tpu_custom_call.1} parent=5 // pred_region
        // Predicated region
        $region73: #{tpu_custom_call.1} parent=71 // pred_check
          %p668 = pneg %p79
        $region74: #{tpu_custom_call.1} parent=71 // pred_check_branch
          %670 = sbr.rel (%p668) target = $region76
        $region75: #{tpu_custom_call.1} parent=71 // pred_region
          %s671 = sand.u32 %s69, 1
          %s672 = scalar_lea.sflag [#allocation3], %s671
          %s673 = sand.u32 %s69, 1
          %s674 = smul.addr %s673, 16
          %s675 = scalar_lea.vmem [#allocation2], %s674
          %s676 = smul.u32 2, %s53
          %s678 = ssub.s32 256, 256
          %679 = vsyncadd %s672, %s678
          %s680 = smul.addr %s676, 2
          %s681 = sadd.s32 1, %s680
          %s682 = smul.addr %s52, 4
          %s683 = sadd.s32 %s681, %s682
          %s684 = smul.addr %s683, 128
          %s685 = scalar_lea.hbm %s0, %s684
          %s686 = sshll.u32 %s675, 4
          %s687 = int_to_ptr.vmem [resolvable:$true] %s686
          %692 = dma.hbm_to_vmem [thread:$0]  %s685, 256, %s687, %s672, 256, 128, 8
        $region76: #{tpu_custom_call.1} parent=71 // pred_fallthru
          _
        // Predicated region
        $region77: #{tpu_custom_call.1} parent=71 // pred_check
          %p693 = pneg %p107
        $region78: #{tpu_custom_call.1} parent=71 // pred_check_branch
          %695 = sbr.rel (%p693) target = $region80
        $region79: #{tpu_custom_call.1} parent=71 // pred_region
          %s696 = sand.u32 %s45, 1
          %s697 = scalar_lea.sflag [#allocation6], %s696
          %s698 = sand.u32 %s97, 1
          %s699 = smul.addr %s698, 16
          %s700 = scalar_lea.vmem [#allocation5], %s699
          %s701 = smul.u32 2, %s53
          %s703 = ssub.s32 256, 256
          %704 = vsyncadd %s697, %s703
          %s705 = smul.addr %s701, 2
          %s706 = smul.addr %s52, 4
          %s707 = sadd.s32 %s705, %s706
          %s708 = smul.addr %s707, 128
          %s709 = scalar_lea.hbm %s1, %s708
          %s710 = sshll.u32 %s700, 4
          %s711 = int_to_ptr.vmem [resolvable:$true] %s710
          %716 = dma.hbm_to_vmem [thread:$0]  %s709, 256, %s711, %s697, 256, 128, 8
        $region80: #{tpu_custom_call.1} parent=71 // pred_fallthru
          _
      $region72: #{tpu_custom_call.1} parent=5 // pred_fallthru
        _
      %p717 = scmp.le.s32.totalorder 1, %s45
      %p718 = scmp.lt.s32.totalorder %s45, 3
      %p719 = pnand %p717, %p718
      %p720 = pneg %p719
      // Predicated region
      $region81: #{tpu_custom_call.1} parent=5 // pred_check
        _
      $region82: #{tpu_custom_call.1} parent=5 // pred_check_branch
        %722 = sbr.rel (%p719) target = $region84
      $region83: #{tpu_custom_call.1} parent=5 // pred_region
        %s723 = ssub.s32 %s45, 1
        %s724 = sand.u32 %s72, 1
        %s725 = scalar_lea.sflag [#allocation3], %s724
        %s726 = sand.u32 %s72, 1
        %s727 = smul.addr %s726, 16
        %s728 = scalar_lea.vmem [#allocation2], %s727
        // Predicated region
        $region85: #{tpu_custom_call.1} parent=83 // pred_check
          %p729 = pneg %p85
        $region86: #{tpu_custom_call.1} parent=83 // pred_check_branch
          %731 = sbr.rel (%p729) target = $region88
        $region87: #{tpu_custom_call.1} parent=83 // pred_region
          %732 = dma.done %s725, 256
        $region88: #{tpu_custom_call.1} parent=83 // pred_fallthru
          _
        %s733 = sand.u32 %s50, 1
        %s734 = scalar_lea.sflag [#allocation6], %s733
        %s735 = sand.u32 %s100, 1
        %s736 = smul.addr %s735, 16
        %s737 = scalar_lea.vmem [#allocation5], %s736
        // Predicated region
        $region89: #{tpu_custom_call.1} parent=83 // pred_check
          %p738 = pneg %p113
        $region90: #{tpu_custom_call.1} parent=83 // pred_check_branch
          %740 = sbr.rel (%p738) target = $region92
        $region91: #{tpu_custom_call.1} parent=83 // pred_region
          %741 = dma.done %s734, 256
        $region92: #{tpu_custom_call.1} parent=83 // pred_fallthru
          _
        // Predicated region
        $region93: #{tpu_custom_call.1} parent=83 // pred_check
          %p742 = pneg %p134
        $region94: #{tpu_custom_call.1} parent=83 // pred_check_branch
          %744 = sbr.rel (%p742) target = $region96
        $region95: #{tpu_custom_call.1} parent=83 // pred_region
          %745 = dma.done [#allocation6], 1024
        $region96: #{tpu_custom_call.1} parent=83 // pred_fallthru
          _
        // Predicated region
        $region97: #{tpu_custom_call.1} parent=83 // pred_check
          %p746 = pneg %p176
        $region98: #{tpu_custom_call.1} parent=83 // pred_check_branch
          %748 = sbr.rel (%p746) target = $region100
        $region99: #{tpu_custom_call.1} parent=83 // pred_region
          %749 = dma.done [#allocation9], 1024
        $region100: #{tpu_custom_call.1} parent=83 // pred_fallthru
          _
        // Predicated region
        $region101: #{tpu_custom_call.1} parent=83 // pred_check
          %p750 = pneg %p218
        $region102: #{tpu_custom_call.1} parent=83 // pred_check_branch
          %752 = sbr.rel (%p750) target = $region104
        $region103: #{tpu_custom_call.1} parent=83 // pred_region
          %753 = dma.done [#allocation9], 1024
        $region104: #{tpu_custom_call.1} parent=83 // pred_fallthru
          _
        // Predicated region
        $region105: #{tpu_custom_call.1} parent=83 // pred_check
          %p754 = pneg %p260
        $region106: #{tpu_custom_call.1} parent=83 // pred_check_branch
          %756 = sbr.rel (%p754) target = $region108
        $region107: #{tpu_custom_call.1} parent=83 // pred_region
          %757 = dma.done [#allocation12], 1024
        $region108: #{tpu_custom_call.1} parent=83 // pred_fallthru
          _
        // Predicated region
        $region109: #{tpu_custom_call.1} parent=83 // pred_check
          %p758 = pneg %p302
        $region110: #{tpu_custom_call.1} parent=83 // pred_check_branch
          %760 = sbr.rel (%p758) target = $region112
        $region111: #{tpu_custom_call.1} parent=83 // pred_region
          %761 = dma.done [#allocation12], 1024
        $region112: #{tpu_custom_call.1} parent=83 // pred_fallthru
          _
        // Predicated region
        $region113: #{tpu_custom_call.1} parent=83 // pred_check
          %p762 = pneg %p344
        $region114: #{tpu_custom_call.1} parent=83 // pred_check_branch
          %764 = sbr.rel (%p762) target = $region116
        $region115: #{tpu_custom_call.1} parent=83 // pred_region
          %765 = dma.done [#allocation15], 1024
        $region116: #{tpu_custom_call.1} parent=83 // pred_fallthru
          _
        %s766 = sand.u32 %s72, 1
        %s767 = scalar_lea.sflag [#allocation3], %s766
        %s768 = sand.u32 %s72, 1
        %s769 = smul.addr %s768, 16
        %s770 = scalar_lea.vmem [#allocation2], %s769
        %p771 = pneg %p85
        %p772 = pneg %p82
        %s773 = sand.u32 %s50, 1
        %s774 = scalar_lea.sflag [#allocation6], %s773
        %s775 = sand.u32 %s100, 1
        %s776 = smul.addr %s775, 16
        %s777 = scalar_lea.vmem [#allocation5], %s776
        %p778 = pneg %p113
        %p779 = pneg %p110
        %p780 = pneg %p134
        %p781 = pneg %p131
        %p782 = pneg %p155
        %p783 = pneg %p152
        %p784 = pneg %p176
        %p785 = pneg %p173
        %p786 = pneg %p197
        %p787 = pneg %p194
        %p788 = pneg %p218
        %p789 = pneg %p215
        %p790 = pneg %p239
        %p791 = pneg %p236
        %p792 = pneg %p260
        %p793 = pneg %p257
        %p794 = pneg %p281
        %p795 = pneg %p278
        %p796 = pneg %p302
        %p797 = pneg %p299
        %p798 = pneg %p323
        %p799 = pneg %p320
        %p800 = pneg %p344
        %p801 = pneg %p341
        %p802 = pneg %p365
        %p803 = pneg %p362
        %p804 = pneg %p386
        %p805 = pneg %p383
        %p806 = pneg %p407
        %p807 = pneg %p404
        %p808 = pneg %p435
        %p809 = pneg %p432
        %s810 = sand.u32 %s422, 1
        %s811 = scalar_lea.sflag [#allocation4], %s810
        %s812 = sand.u32 %s422, 1
        %s813 = smul.addr %s812, 8
        %s814 = scalar_lea.vmem [#allocation16], %s813
        %p815 = pneg %p463
        %p816 = pneg %p460
        %s817 = sand.u32 %s50, 1
        %s818 = scalar_lea.sflag [#allocation18], %s817
        %s819 = sand.u32 %s450, 1
        %s820 = smul.addr %s819, 16
        %s821 = scalar_lea.vmem [#allocation17], %s820
        %p822 = pneg %p491
        %p823 = pneg %p488
        %s824 = sand.u32 %s50, 1
        %s825 = scalar_lea.sflag [#allocation18], %s824
        %s826 = sand.u32 %s478, 1
        %s827 = smul.addr %s826, 8
        %s828 = scalar_lea.vmem [#allocation19], %s827
        %p829 = pneg %p519
        %p830 = pneg %p516
        %s831 = sand.u32 %s50, 1
        %s832 = scalar_lea.sflag [#allocation21], %s831
        %s833 = sand.u32 %s506, 1
        %s834 = smul.addr %s833, 16
        %s835 = scalar_lea.vmem [#allocation20], %s834
        %p836 = pneg %p547
        %p837 = pneg %p544
        %s838 = sand.u32 %s50, 1
        %s839 = scalar_lea.sflag [#allocation21], %s838
        %s840 = sand.u32 %s534, 1
        %s841 = smul.addr %s840, 16
        %s842 = scalar_lea.vmem [#allocation22], %s841
        %s843 = smul.u32 2, %s55
        %s844 = smul.u32 2, %s55
        %s845 = smul.u32 2, %s55
        %s846 = smul.u32 2, %s55
        %s847 = smul.u32 2, %s55
        %s848 = smul.u32 2, %s55
        %s849 = smul.u32 2, %s55
        %v851 = vld [vmem:[%s728] sm:$0xff]
        %v852 = vld [vmem:[%s728 + $0x8] sm:$0xff]
        %v853 = vpack.c.bf16 %v852, %v851
        %v854 = vld [vmem:[#allocation7] sm:$0xf]
        %v855 = vld [vmem:[#allocation7 + $0x4] sm:$0xf]
        %v856 = vld [vmem:[#allocation7 + $0x8] sm:$0xf]
        %v857 = vld [vmem:[#allocation7 + $0xc] sm:$0xf]
        %v858 = vld [vmem:[#allocation7 + $0x10] sm:$0xf]
        %v859 = vld [vmem:[#allocation7 + $0x14] sm:$0xf]
        %v860 = vld [vmem:[#allocation7 + $0x18] sm:$0xf]
        %v861 = vld [vmem:[#allocation7 + $0x1c] sm:$0xf]
        %v862 = vld [vmem:[#allocation7 + $0x20] sm:$0xf]
        %v863 = vld [vmem:[#allocation7 + $0x24] sm:$0xf]
        %v864 = vld [vmem:[#allocation7 + $0x28] sm:$0xf]
        %v865 = vld [vmem:[#allocation7 + $0x2c] sm:$0xf]
        %v866 = vld [vmem:[#allocation7 + $0x30] sm:$0xf]
        %v867 = vld [vmem:[#allocation7 + $0x34] sm:$0xf]
        %v868 = vld [vmem:[#allocation7 + $0x38] sm:$0xf]
        %v869 = vld [vmem:[#allocation7 + $0x3c] sm:$0xf]
        %v870 = vld [vmem:[%s3] sm:$0x1]
        %v872 = vlaneseq
        %v873 = vshrl.u32 %v872, 7
        %v874 = vsub.s32 0, %v873
        %v875 = vrot.slane %v870, %v874
        %v893 = vunpack.c.l.b16 %v854
        %v894 = vunpack.c.l.b16 %v855
        %v895 = vunpack.c.l.b16 %v856
        %v896 = vunpack.c.l.b16 %v857
        %v897 = vunpack.c.l.b16 %v858
        %v898 = vunpack.c.l.b16 %v859
        %v899 = vunpack.c.l.b16 %v860
        %v900 = vunpack.c.l.b16 %v861
        %v901 = vunpack.c.l.b16 %v862
        %v902 = vunpack.c.l.b16 %v863
        %v903 = vunpack.c.l.b16 %v864
        %v904 = vunpack.c.l.b16 %v865
        %v905 = vunpack.c.l.b16 %v866
        %v906 = vunpack.c.l.b16 %v867
        %v907 = vunpack.c.l.b16 %v868
        %v908 = vunpack.c.l.b16 %v869
        %v909 = vpack.c.b16 %v894, %v893
        %v910 = vpack.c.b16 %v896, %v895
        %v911 = vpack.c.b16 %v898, %v897
        %v912 = vpack.c.b16 %v900, %v899
        %v913 = vpack.c.b16 %v902, %v901
        %v914 = vpack.c.b16 %v904, %v903
        %v915 = vpack.c.b16 %v906, %v905
        %v916 = vpack.c.b16 %v908, %v907
        %925 = vmatprep.subr.bf16.mxu0 0
        %926 = vmatpush1.bf16.msra.mxu0 %v916
        %927 = vmatprep.subr.bf16.mxu0 0
        %928 = vmatpush1.bf16.msra.mxu0 %v915
        %929 = vmatprep.subr.bf16.mxu0 0
        %930 = vmatpush1.bf16.msra.mxu0 %v914
        %931 = vmatprep.subr.bf16.mxu0 0
        %932 = vmatpush1.bf16.msra.mxu0 %v913
        %933 = vmatprep.subr.bf16.mxu0 0
        %934 = vmatpush1.bf16.msra.mxu0 %v912
        %935 = vmatprep.subr.bf16.mxu0 0
        %936 = vmatpush1.bf16.msra.mxu0 %v911
        %937 = vmatprep.subr.bf16.mxu0 0
        %938 = vmatpush1.bf16.msra.mxu0 %v910
        %939 = vmatprep.subr.bf16.mxu0 0
        %940 = vmatpush1.bf16.msra.mxu0 %v909
        %941 = vmatprep.subr.bf16.mxu0 0
        %942 = vmatpush2.bf16.msra.mxu0 0
        %943 = vmatprep.subr.bf16.mxu0 0
        %944 = vmatpush2.bf16.msra.mxu0 0
        %945 = vmatprep.subr.bf16.mxu0 0
        %946 = vmatpush2.bf16.msra.mxu0 0
        %947 = vmatprep.subr.bf16.mxu0 0
        %948 = vmatpush2.bf16.msra.mxu0 0
        %949 = vmatprep.subr.bf16.mxu0 0
        %950 = vmatpush2.bf16.msra.mxu0 0
        %951 = vmatprep.subr.bf16.mxu0 0
        %952 = vmatpush2.bf16.msra.mxu0 0
        %953 = vmatprep.subr.bf16.mxu0 0
        %954 = vmatpush2.bf16.msra.mxu0 0
        %955 = vmatprep.subr.bf16.mxu0 0
        %956 = vmatpush2.bf16.msra.mxu0 0
        %957 = vmatprep.mubr.bf16.mxu0 0
        %958 = vmatmul.mubr.bf16.gmra.mxu0 %v853
        %v959 = vpop.f32.mrf.mxu0
        %v960 = vadd.f32 %v875, %v959
        %v961 = vpop.f32.mrf.mxu0
        %v962 = vpop.f32.mrf.mxu0
        %v963 = vadd.f32 %v875, %v962
        %v964 = vpop.f32.mrf.mxu0
        %965 = vdwg.mxu0
        %v966 = vmax.f32 %v960, 0.0
        %v967 = vmax.f32 %v963, 0.0
        %v968 = vpack.c.bf16 %v967, %v966
        %v969 = vld [vmem:[#allocation8] sm:$0xf]
        %v970 = vld [vmem:[#allocation8 + $0x4] sm:$0xf]
        %v971 = vld [vmem:[#allocation8 + $0x8] sm:$0xf]
        %v972 = vld [vmem:[#allocation8 + $0xc] sm:$0xf]
        %v973 = vld [vmem:[#allocation8 + $0x10] sm:$0xf]
        %v974 = vld [vmem:[#allocation8 + $0x14] sm:$0xf]
        %v975 = vld [vmem:[#allocation8 + $0x18] sm:$0xf]
        %v976 = vld [vmem:[#allocation8 + $0x1c] sm:$0xf]
        %v977 = vld [vmem:[#allocation8 + $0x20] sm:$0xf]
        %v978 = vld [vmem:[#allocation8 + $0x24] sm:$0xf]
        %v979 = vld [vmem:[#allocation8 + $0x28] sm:$0xf]
        %v980 = vld [vmem:[#allocation8 + $0x2c] sm:$0xf]
        %v981 = vld [vmem:[#allocation8 + $0x30] sm:$0xf]
        %v982 = vld [vmem:[#allocation8 + $0x34] sm:$0xf]
        %v983 = vld [vmem:[#allocation8 + $0x38] sm:$0xf]
        %v984 = vld [vmem:[#allocation8 + $0x3c] sm:$0xf]
        %v985 = vld [vmem:[%s5] sm:$0x1]
        %v987 = vlaneseq
        %v988 = vshrl.u32 %v987, 7
        %v989 = vsub.s32 0, %v988
        %v990 = vrot.slane %v985, %v989
        %v1008 = vunpack.c.l.b16 %v969
        %v1009 = vunpack.c.l.b16 %v970
        %v1010 = vunpack.c.l.b16 %v971
        %v1011 = vunpack.c.l.b16 %v972
        %v1012 = vunpack.c.l.b16 %v973
        %v1013 = vunpack.c.l.b16 %v974
        %v1014 = vunpack.c.l.b16 %v975
        %v1015 = vunpack.c.l.b16 %v976
        %v1016 = vunpack.c.l.b16 %v977
        %v1017 = vunpack.c.l.b16 %v978
        %v1018 = vunpack.c.l.b16 %v979
        %v1019 = vunpack.c.l.b16 %v980
        %v1020 = vunpack.c.l.b16 %v981
        %v1021 = vunpack.c.l.b16 %v982
        %v1022 = vunpack.c.l.b16 %v983
        %v1023 = vunpack.c.l.b16 %v984
        %v1024 = vpack.c.b16 %v1009, %v1008
        %v1025 = vpack.c.b16 %v1011, %v1010
        %v1026 = vpack.c.b16 %v1013, %v1012
        %v1027 = vpack.c.b16 %v1015, %v1014
        %v1028 = vpack.c.b16 %v1017, %v1016
        %v1029 = vpack.c.b16 %v1019, %v1018
        %v1030 = vpack.c.b16 %v1021, %v1020
        %v1031 = vpack.c.b16 %v1023, %v1022
        %1040 = vmatprep.subr.bf16.mxu0 0
        %1041 = vmatpush1.bf16.msra.mxu0 %v1031
        %1042 = vmatprep.subr.bf16.mxu0 0
        %1043 = vmatpush1.bf16.msra.mxu0 %v1030
        %1044 = vmatprep.subr.bf16.mxu0 0
        %1045 = vmatpush1.bf16.msra.mxu0 %v1029
        %1046 = vmatprep.subr.bf16.mxu0 0
        %1047 = vmatpush1.bf16.msra.mxu0 %v1028
        %1048 = vmatprep.subr.bf16.mxu0 0
        %1049 = vmatpush1.bf16.msra.mxu0 %v1027
        %1050 = vmatprep.subr.bf16.mxu0 0
        %1051 = vmatpush1.bf16.msra.mxu0 %v1026
        %1052 = vmatprep.subr.bf16.mxu0 0
        %1053 = vmatpush1.bf16.msra.mxu0 %v1025
        %1054 = vmatprep.subr.bf16.mxu0 0
        %1055 = vmatpush1.bf16.msra.mxu0 %v1024
        %1056 = vmatprep.subr.bf16.mxu0 0
        %1057 = vmatpush2.bf16.msra.mxu0 0
        %1058 = vmatprep.subr.bf16.mxu0 0
        %1059 = vmatpush2.bf16.msra.mxu0 0
        %1060 = vmatprep.subr.bf16.mxu0 0
        %1061 = vmatpush2.bf16.msra.mxu0 0
        %1062 = vmatprep.subr.bf16.mxu0 0
        %1063 = vmatpush2.bf16.msra.mxu0 0
        %1064 = vmatprep.subr.bf16.mxu0 0
        %1065 = vmatpush2.bf16.msra.mxu0 0
        %1066 = vmatprep.subr.bf16.mxu0 0
        %1067 = vmatpush2.bf16.msra.mxu0 0
        %1068 = vmatprep.subr.bf16.mxu0 0
        %1069 = vmatpush2.bf16.msra.mxu0 0
        %1070 = vmatprep.subr.bf16.mxu0 0
        %1071 = vmatpush2.bf16.msra.mxu0 0
        %1072 = vmatprep.mubr.bf16.mxu0 0
        %1073 = vmatmul.mubr.bf16.gmra.mxu0 %v968
        %v1074 = vpop.f32.mrf.mxu0
        %v1075 = vadd.f32 %v990, %v1074
        %v1076 = vpop.f32.mrf.mxu0
        %v1077 = vpop.f32.mrf.mxu0
        %v1078 = vadd.f32 %v990, %v1077
        %v1079 = vpop.f32.mrf.mxu0
        %1080 = vdwg.mxu0
        %v1081 = vmax.f32 %v1075, 0.0
        %v1082 = vmax.f32 %v1078, 0.0
        %v1083 = vpack.c.bf16 %v1082, %v1081
        %v1085 = vunpack.c.l.b16 %v1083
        %v1086 = vunpack.c.h.b16 %v1083
        %v1087 = vpack.c.b16 %v1085, %v1085
        %v1088 = vpack.c.b16 %v1086, %v1086
        %1091 = vst [vmem:[%s814] sm:$0xf] %v1087
        %1092 = vst [vmem:[%s814 + $0x4] sm:$0xf] %v1088
        %v1093 = vld [vmem:[#allocation10] sm:$0xf]
        %v1094 = vld [vmem:[#allocation10 + $0x4] sm:$0xf]
        %v1095 = vld [vmem:[#allocation10 + $0x8] sm:$0xf]
        %v1096 = vld [vmem:[#allocation10 + $0xc] sm:$0xf]
        %v1097 = vld [vmem:[#allocation10 + $0x10] sm:$0xf]
        %v1098 = vld [vmem:[#allocation10 + $0x14] sm:$0xf]
        %v1099 = vld [vmem:[#allocation10 + $0x18] sm:$0xf]
        %v1100 = vld [vmem:[#allocation10 + $0x1c] sm:$0xf]
        %v1101 = vld [vmem:[#allocation10 + $0x20] sm:$0xf]
        %v1102 = vld [vmem:[#allocation10 + $0x24] sm:$0xf]
        %v1103 = vld [vmem:[#allocation10 + $0x28] sm:$0xf]
        %v1104 = vld [vmem:[#allocation10 + $0x2c] sm:$0xf]
        %v1105 = vld [vmem:[#allocation10 + $0x30] sm:$0xf]
        %v1106 = vld [vmem:[#allocation10 + $0x34] sm:$0xf]
        %v1107 = vld [vmem:[#allocation10 + $0x38] sm:$0xf]
        %v1108 = vld [vmem:[#allocation10 + $0x3c] sm:$0xf]
        %v1109 = vld [vmem:[%s7] sm:$0x1]
        %v1111 = vlaneseq
        %v1112 = vshrl.u32 %v1111, 7
        %v1113 = vsub.s32 0, %v1112
        %v1114 = vrot.slane %v1109, %v1113
        %v1132 = vunpack.c.l.b16 %v1093
        %v1133 = vunpack.c.l.b16 %v1094
        %v1134 = vunpack.c.l.b16 %v1095
        %v1135 = vunpack.c.l.b16 %v1096
        %v1136 = vunpack.c.l.b16 %v1097
        %v1137 = vunpack.c.l.b16 %v1098
        %v1138 = vunpack.c.l.b16 %v1099
        %v1139 = vunpack.c.l.b16 %v1100
        %v1140 = vunpack.c.l.b16 %v1101
        %v1141 = vunpack.c.l.b16 %v1102
        %v1142 = vunpack.c.l.b16 %v1103
        %v1143 = vunpack.c.l.b16 %v1104
        %v1144 = vunpack.c.l.b16 %v1105
        %v1145 = vunpack.c.l.b16 %v1106
        %v1146 = vunpack.c.l.b16 %v1107
        %v1147 = vunpack.c.l.b16 %v1108
        %v1148 = vpack.c.b16 %v1133, %v1132
        %v1149 = vpack.c.b16 %v1135, %v1134
        %v1150 = vpack.c.b16 %v1137, %v1136
        %v1151 = vpack.c.b16 %v1139, %v1138
        %v1152 = vpack.c.b16 %v1141, %v1140
        %v1153 = vpack.c.b16 %v1143, %v1142
        %v1154 = vpack.c.b16 %v1145, %v1144
        %v1155 = vpack.c.b16 %v1147, %v1146
        %1164 = vmatprep.subr.bf16.mxu0 0
        %1165 = vmatpush1.bf16.msra.mxu0 %v1155
        %1166 = vmatprep.subr.bf16.mxu0 0
        %1167 = vmatpush1.bf16.msra.mxu0 %v1154
        %1168 = vmatprep.subr.bf16.mxu0 0
        %1169 = vmatpush1.bf16.msra.mxu0 %v1153
        %1170 = vmatprep.subr.bf16.mxu0 0
        %1171 = vmatpush1.bf16.msra.mxu0 %v1152
        %1172 = vmatprep.subr.bf16.mxu0 0
        %1173 = vmatpush1.bf16.msra.mxu0 %v1151
        %1174 = vmatprep.subr.bf16.mxu0 0
        %1175 = vmatpush1.bf16.msra.mxu0 %v1150
        %1176 = vmatprep.subr.bf16.mxu0 0
        %1177 = vmatpush1.bf16.msra.mxu0 %v1149
        %1178 = vmatprep.subr.bf16.mxu0 0
        %1179 = vmatpush1.bf16.msra.mxu0 %v1148
        %1180 = vmatprep.subr.bf16.mxu0 0
        %1181 = vmatpush2.bf16.msra.mxu0 0
        %1182 = vmatprep.subr.bf16.mxu0 0
        %1183 = vmatpush2.bf16.msra.mxu0 0
        %1184 = vmatprep.subr.bf16.mxu0 0
        %1185 = vmatpush2.bf16.msra.mxu0 0
        %1186 = vmatprep.subr.bf16.mxu0 0
        %1187 = vmatpush2.bf16.msra.mxu0 0
        %1188 = vmatprep.subr.bf16.mxu0 0
        %1189 = vmatpush2.bf16.msra.mxu0 0
        %1190 = vmatprep.subr.bf16.mxu0 0
        %1191 = vmatpush2.bf16.msra.mxu0 0
        %1192 = vmatprep.subr.bf16.mxu0 0
        %1193 = vmatpush2.bf16.msra.mxu0 0
        %1194 = vmatprep.subr.bf16.mxu0 0
        %1195 = vmatpush2.bf16.msra.mxu0 0
        %1196 = vmatprep.mubr.bf16.mxu0 0
        %1197 = vmatmul.mubr.bf16.gmra.mxu0 %v1083
        %v1198 = vpop.f32.mrf.mxu0
        %v1199 = vadd.f32 %v1114, %v1198
        %v1200 = vpop.f32.mrf.mxu0
        %v1201 = vpop.f32.mrf.mxu0
        %v1202 = vadd.f32 %v1114, %v1201
        %v1203 = vpop.f32.mrf.mxu0
        %1204 = vdwg.mxu0
        %1205 = vst [vmem:[%s821] sm:$0xff] %v1199
        %1206 = vst [vmem:[%s821 + $0x8] sm:$0xff] %v1202
        %v1207 = vld [vmem:[%s737] sm:$0xff]
        %v1208 = vld [vmem:[%s737 + $0x8] sm:$0xff]
        %v1209 = vpack.c.bf16 %v1208, %v1207
        %v1210 = vld [vmem:[#allocation11] sm:$0xf]
        %v1211 = vld [vmem:[#allocation11 + $0x4] sm:$0xf]
        %v1212 = vld [vmem:[#allocation11 + $0x8] sm:$0xf]
        %v1213 = vld [vmem:[#allocation11 + $0xc] sm:$0xf]
        %v1214 = vld [vmem:[#allocation11 + $0x10] sm:$0xf]
        %v1215 = vld [vmem:[#allocation11 + $0x14] sm:$0xf]
        %v1216 = vld [vmem:[#allocation11 + $0x18] sm:$0xf]
        %v1217 = vld [vmem:[#allocation11 + $0x1c] sm:$0xf]
        %v1218 = vld [vmem:[#allocation11 + $0x20] sm:$0xf]
        %v1219 = vld [vmem:[#allocation11 + $0x24] sm:$0xf]
        %v1220 = vld [vmem:[#allocation11 + $0x28] sm:$0xf]
        %v1221 = vld [vmem:[#allocation11 + $0x2c] sm:$0xf]
        %v1222 = vld [vmem:[#allocation11 + $0x30] sm:$0xf]
        %v1223 = vld [vmem:[#allocation11 + $0x34] sm:$0xf]
        %v1224 = vld [vmem:[#allocation11 + $0x38] sm:$0xf]
        %v1225 = vld [vmem:[#allocation11 + $0x3c] sm:$0xf]
        %v1226 = vld [vmem:[%s9] sm:$0x1]
        %v1228 = vlaneseq
        %v1229 = vshrl.u32 %v1228, 7
        %v1230 = vsub.s32 0, %v1229
        %v1231 = vrot.slane %v1226, %v1230
        %v1249 = vunpack.c.l.b16 %v1210
        %v1250 = vunpack.c.l.b16 %v1211
        %v1251 = vunpack.c.l.b16 %v1212
        %v1252 = vunpack.c.l.b16 %v1213
        %v1253 = vunpack.c.l.b16 %v1214
        %v1254 = vunpack.c.l.b16 %v1215
        %v1255 = vunpack.c.l.b16 %v1216
        %v1256 = vunpack.c.l.b16 %v1217
        %v1257 = vunpack.c.l.b16 %v1218
        %v1258 = vunpack.c.l.b16 %v1219
        %v1259 = vunpack.c.l.b16 %v1220
        %v1260 = vunpack.c.l.b16 %v1221
        %v1261 = vunpack.c.l.b16 %v1222
        %v1262 = vunpack.c.l.b16 %v1223
        %v1263 = vunpack.c.l.b16 %v1224
        %v1264 = vunpack.c.l.b16 %v1225
        %v1265 = vpack.c.b16 %v1250, %v1249
        %v1266 = vpack.c.b16 %v1252, %v1251
        %v1267 = vpack.c.b16 %v1254, %v1253
        %v1268 = vpack.c.b16 %v1256, %v1255
        %v1269 = vpack.c.b16 %v1258, %v1257
        %v1270 = vpack.c.b16 %v1260, %v1259
        %v1271 = vpack.c.b16 %v1262, %v1261
        %v1272 = vpack.c.b16 %v1264, %v1263
        %1281 = vmatprep.subr.bf16.mxu0 0
        %1282 = vmatpush1.bf16.msra.mxu0 %v1272
        %1283 = vmatprep.subr.bf16.mxu0 0
        %1284 = vmatpush1.bf16.msra.mxu0 %v1271
        %1285 = vmatprep.subr.bf16.mxu0 0
        %1286 = vmatpush1.bf16.msra.mxu0 %v1270
        %1287 = vmatprep.subr.bf16.mxu0 0
        %1288 = vmatpush1.bf16.msra.mxu0 %v1269
        %1289 = vmatprep.subr.bf16.mxu0 0
        %1290 = vmatpush1.bf16.msra.mxu0 %v1268
        %1291 = vmatprep.subr.bf16.mxu0 0
        %1292 = vmatpush1.bf16.msra.mxu0 %v1267
        %1293 = vmatprep.subr.bf16.mxu0 0
        %1294 = vmatpush1.bf16.msra.mxu0 %v1266
        %1295 = vmatprep.subr.bf16.mxu0 0
        %1296 = vmatpush1.bf16.msra.mxu0 %v1265
        %1297 = vmatprep.subr.bf16.mxu0 0
        %1298 = vmatpush2.bf16.msra.mxu0 0
        %1299 = vmatprep.subr.bf16.mxu0 0
        %1300 = vmatpush2.bf16.msra.mxu0 0
        %1301 = vmatprep.subr.bf16.mxu0 0
        %1302 = vmatpush2.bf16.msra.mxu0 0
        %1303 = vmatprep.subr.bf16.mxu0 0
        %1304 = vmatpush2.bf16.msra.mxu0 0
        %1305 = vmatprep.subr.bf16.mxu0 0
        %1306 = vmatpush2.bf16.msra.mxu0 0
        %1307 = vmatprep.subr.bf16.mxu0 0
        %1308 = vmatpush2.bf16.msra.mxu0 0
        %1309 = vmatprep.subr.bf16.mxu0 0
        %1310 = vmatpush2.bf16.msra.mxu0 0
        %1311 = vmatprep.subr.bf16.mxu0 0
        %1312 = vmatpush2.bf16.msra.mxu0 0
        %1313 = vmatprep.mubr.bf16.mxu0 0
        %1314 = vmatmul.mubr.bf16.gmra.mxu0 %v1209
        %v1315 = vpop.f32.mrf.mxu0
        %v1316 = vadd.f32 %v1231, %v1315
        %v1317 = vpop.f32.mrf.mxu0
        %v1318 = vpop.f32.mrf.mxu0
        %v1319 = vadd.f32 %v1231, %v1318
        %v1320 = vpop.f32.mrf.mxu0
        %1321 = vdwg.mxu0
        %v1322 = vmax.f32 %v1316, 0.0
        %v1323 = vmax.f32 %v1319, 0.0
        %v1324 = vpack.c.bf16 %v1323, %v1322
        %v1325 = vld [vmem:[#allocation13] sm:$0xf]
        %v1326 = vld [vmem:[#allocation13 + $0x4] sm:$0xf]
        %v1327 = vld [vmem:[#allocation13 + $0x8] sm:$0xf]
        %v1328 = vld [vmem:[#allocation13 + $0xc] sm:$0xf]
        %v1329 = vld [vmem:[#allocation13 + $0x10] sm:$0xf]
        %v1330 = vld [vmem:[#allocation13 + $0x14] sm:$0xf]
        %v1331 = vld [vmem:[#allocation13 + $0x18] sm:$0xf]
        %v1332 = vld [vmem:[#allocation13 + $0x1c] sm:$0xf]
        %v1333 = vld [vmem:[#allocation13 + $0x20] sm:$0xf]
        %v1334 = vld [vmem:[#allocation13 + $0x24] sm:$0xf]
        %v1335 = vld [vmem:[#allocation13 + $0x28] sm:$0xf]
        %v1336 = vld [vmem:[#allocation13 + $0x2c] sm:$0xf]
        %v1337 = vld [vmem:[#allocation13 + $0x30] sm:$0xf]
        %v1338 = vld [vmem:[#allocation13 + $0x34] sm:$0xf]
        %v1339 = vld [vmem:[#allocation13 + $0x38] sm:$0xf]
        %v1340 = vld [vmem:[#allocation13 + $0x3c] sm:$0xf]
        %v1341 = vld [vmem:[%s11] sm:$0x1]
        %v1343 = vlaneseq
        %v1344 = vshrl.u32 %v1343, 7
        %v1345 = vsub.s32 0, %v1344
        %v1346 = vrot.slane %v1341, %v1345
        %v1364 = vunpack.c.l.b16 %v1325
        %v1365 = vunpack.c.l.b16 %v1326
        %v1366 = vunpack.c.l.b16 %v1327
        %v1367 = vunpack.c.l.b16 %v1328
        %v1368 = vunpack.c.l.b16 %v1329
        %v1369 = vunpack.c.l.b16 %v1330
        %v1370 = vunpack.c.l.b16 %v1331
        %v1371 = vunpack.c.l.b16 %v1332
        %v1372 = vunpack.c.l.b16 %v1333
        %v1373 = vunpack.c.l.b16 %v1334
        %v1374 = vunpack.c.l.b16 %v1335
        %v1375 = vunpack.c.l.b16 %v1336
        %v1376 = vunpack.c.l.b16 %v1337
        %v1377 = vunpack.c.l.b16 %v1338
        %v1378 = vunpack.c.l.b16 %v1339
        %v1379 = vunpack.c.l.b16 %v1340
        %v1380 = vpack.c.b16 %v1365, %v1364
        %v1381 = vpack.c.b16 %v1367, %v1366
        %v1382 = vpack.c.b16 %v1369, %v1368
        %v1383 = vpack.c.b16 %v1371, %v1370
        %v1384 = vpack.c.b16 %v1373, %v1372
        %v1385 = vpack.c.b16 %v1375, %v1374
        %v1386 = vpack.c.b16 %v1377, %v1376
        %v1387 = vpack.c.b16 %v1379, %v1378
        %1396 = vmatprep.subr.bf16.mxu0 0
        %1397 = vmatpush1.bf16.msra.mxu0 %v1387
        %1398 = vmatprep.subr.bf16.mxu0 0
        %1399 = vmatpush1.bf16.msra.mxu0 %v1386
        %1400 = vmatprep.subr.bf16.mxu0 0
        %1401 = vmatpush1.bf16.msra.mxu0 %v1385
        %1402 = vmatprep.subr.bf16.mxu0 0
        %1403 = vmatpush1.bf16.msra.mxu0 %v1384
        %1404 = vmatprep.subr.bf16.mxu0 0
        %1405 = vmatpush1.bf16.msra.mxu0 %v1383
        %1406 = vmatprep.subr.bf16.mxu0 0
        %1407 = vmatpush1.bf16.msra.mxu0 %v1382
        %1408 = vmatprep.subr.bf16.mxu0 0
        %1409 = vmatpush1.bf16.msra.mxu0 %v1381
        %1410 = vmatprep.subr.bf16.mxu0 0
        %1411 = vmatpush1.bf16.msra.mxu0 %v1380
        %1412 = vmatprep.subr.bf16.mxu0 0
        %1413 = vmatpush2.bf16.msra.mxu0 0
        %1414 = vmatprep.subr.bf16.mxu0 0
        %1415 = vmatpush2.bf16.msra.mxu0 0
        %1416 = vmatprep.subr.bf16.mxu0 0
        %1417 = vmatpush2.bf16.msra.mxu0 0
        %1418 = vmatprep.subr.bf16.mxu0 0
        %1419 = vmatpush2.bf16.msra.mxu0 0
        %1420 = vmatprep.subr.bf16.mxu0 0
        %1421 = vmatpush2.bf16.msra.mxu0 0
        %1422 = vmatprep.subr.bf16.mxu0 0
        %1423 = vmatpush2.bf16.msra.mxu0 0
        %1424 = vmatprep.subr.bf16.mxu0 0
        %1425 = vmatpush2.bf16.msra.mxu0 0
        %1426 = vmatprep.subr.bf16.mxu0 0
        %1427 = vmatpush2.bf16.msra.mxu0 0
        %1428 = vmatprep.mubr.bf16.mxu0 0
        %1429 = vmatmul.mubr.bf16.gmra.mxu0 %v1324
        %v1430 = vpop.f32.mrf.mxu0
        %v1431 = vadd.f32 %v1346, %v1430
        %v1432 = vpop.f32.mrf.mxu0
        %v1433 = vpop.f32.mrf.mxu0
        %v1434 = vadd.f32 %v1346, %v1433
        %v1435 = vpop.f32.mrf.mxu0
        %1436 = vdwg.mxu0
        %v1437 = vmax.f32 %v1431, 0.0
        %v1438 = vmax.f32 %v1434, 0.0
        %v1439 = vpack.c.bf16 %v1438, %v1437
        %v1441 = vunpack.c.l.b16 %v1439
        %v1442 = vunpack.c.h.b16 %v1439
        %v1443 = vpack.c.b16 %v1441, %v1441
        %v1444 = vpack.c.b16 %v1442, %v1442
        %1447 = vst [vmem:[%s828] sm:$0xf] %v1443
        %1448 = vst [vmem:[%s828 + $0x4] sm:$0xf] %v1444
        %v1449 = vld [vmem:[#allocation14] sm:$0xf]
        %v1450 = vld [vmem:[#allocation14 + $0x4] sm:$0xf]
        %v1451 = vld [vmem:[#allocation14 + $0x8] sm:$0xf]
        %v1452 = vld [vmem:[#allocation14 + $0xc] sm:$0xf]
        %v1453 = vld [vmem:[#allocation14 + $0x10] sm:$0xf]
        %v1454 = vld [vmem:[#allocation14 + $0x14] sm:$0xf]
        %v1455 = vld [vmem:[#allocation14 + $0x18] sm:$0xf]
        %v1456 = vld [vmem:[#allocation14 + $0x1c] sm:$0xf]
        %v1457 = vld [vmem:[#allocation14 + $0x20] sm:$0xf]
        %v1458 = vld [vmem:[#allocation14 + $0x24] sm:$0xf]
        %v1459 = vld [vmem:[#allocation14 + $0x28] sm:$0xf]
        %v1460 = vld [vmem:[#allocation14 + $0x2c] sm:$0xf]
        %v1461 = vld [vmem:[#allocation14 + $0x30] sm:$0xf]
        %v1462 = vld [vmem:[#allocation14 + $0x34] sm:$0xf]
        %v1463 = vld [vmem:[#allocation14 + $0x38] sm:$0xf]
        %v1464 = vld [vmem:[#allocation14 + $0x3c] sm:$0xf]
        %v1465 = vld [vmem:[%s13] sm:$0x1]
        %v1467 = vlaneseq
        %v1468 = vshrl.u32 %v1467, 7
        %v1469 = vsub.s32 0, %v1468
        %v1470 = vrot.slane %v1465, %v1469
        %v1488 = vunpack.c.l.b16 %v1449
        %v1489 = vunpack.c.l.b16 %v1450
        %v1490 = vunpack.c.l.b16 %v1451
        %v1491 = vunpack.c.l.b16 %v1452
        %v1492 = vunpack.c.l.b16 %v1453
        %v1493 = vunpack.c.l.b16 %v1454
        %v1494 = vunpack.c.l.b16 %v1455
        %v1495 = vunpack.c.l.b16 %v1456
        %v1496 = vunpack.c.l.b16 %v1457
        %v1497 = vunpack.c.l.b16 %v1458
        %v1498 = vunpack.c.l.b16 %v1459
        %v1499 = vunpack.c.l.b16 %v1460
        %v1500 = vunpack.c.l.b16 %v1461
        %v1501 = vunpack.c.l.b16 %v1462
        %v1502 = vunpack.c.l.b16 %v1463
        %v1503 = vunpack.c.l.b16 %v1464
        %v1504 = vpack.c.b16 %v1489, %v1488
        %v1505 = vpack.c.b16 %v1491, %v1490
        %v1506 = vpack.c.b16 %v1493, %v1492
        %v1507 = vpack.c.b16 %v1495, %v1494
        %v1508 = vpack.c.b16 %v1497, %v1496
        %v1509 = vpack.c.b16 %v1499, %v1498
        %v1510 = vpack.c.b16 %v1501, %v1500
        %v1511 = vpack.c.b16 %v1503, %v1502
        %1520 = vmatprep.subr.bf16.mxu0 0
        %1521 = vmatpush1.bf16.msra.mxu0 %v1511
        %1522 = vmatprep.subr.bf16.mxu0 0
        %1523 = vmatpush1.bf16.msra.mxu0 %v1510
        %1524 = vmatprep.subr.bf16.mxu0 0
        %1525 = vmatpush1.bf16.msra.mxu0 %v1509
        %1526 = vmatprep.subr.bf16.mxu0 0
        %1527 = vmatpush1.bf16.msra.mxu0 %v1508
        %1528 = vmatprep.subr.bf16.mxu0 0
        %1529 = vmatpush1.bf16.msra.mxu0 %v1507
        %1530 = vmatprep.subr.bf16.mxu0 0
        %1531 = vmatpush1.bf16.msra.mxu0 %v1506
        %1532 = vmatprep.subr.bf16.mxu0 0
        %1533 = vmatpush1.bf16.msra.mxu0 %v1505
        %1534 = vmatprep.subr.bf16.mxu0 0
        %1535 = vmatpush1.bf16.msra.mxu0 %v1504
        %1536 = vmatprep.subr.bf16.mxu0 0
        %1537 = vmatpush2.bf16.msra.mxu0 0
        %1538 = vmatprep.subr.bf16.mxu0 0
        %1539 = vmatpush2.bf16.msra.mxu0 0
        %1540 = vmatprep.subr.bf16.mxu0 0
        %1541 = vmatpush2.bf16.msra.mxu0 0
        %1542 = vmatprep.subr.bf16.mxu0 0
        %1543 = vmatpush2.bf16.msra.mxu0 0
        %1544 = vmatprep.subr.bf16.mxu0 0
        %1545 = vmatpush2.bf16.msra.mxu0 0
        %1546 = vmatprep.subr.bf16.mxu0 0
        %1547 = vmatpush2.bf16.msra.mxu0 0
        %1548 = vmatprep.subr.bf16.mxu0 0
        %1549 = vmatpush2.bf16.msra.mxu0 0
        %1550 = vmatprep.subr.bf16.mxu0 0
        %1551 = vmatpush2.bf16.msra.mxu0 0
        %1552 = vmatprep.mubr.bf16.mxu0 0
        %1553 = vmatmul.mubr.bf16.gmra.mxu0 %v1439
        %v1554 = vpop.f32.mrf.mxu0
        %v1555 = vadd.f32 %v1470, %v1554
        %v1556 = vpop.f32.mrf.mxu0
        %v1557 = vpop.f32.mrf.mxu0
        %v1558 = vadd.f32 %v1470, %v1557
        %v1559 = vpop.f32.mrf.mxu0
        %1560 = vdwg.mxu0
        %1561 = vst [vmem:[%s835] sm:$0xff] %v1555
        %1562 = vst [vmem:[%s835 + $0x8] sm:$0xff] %v1558
        %v1563 = vld [vmem:[%s15] sm:$0x1]
        %v1565 = vlaneseq
        %v1566 = vshrl.u32 %v1565, 7
        %v1567 = vsub.s32 0, %v1566
        %v1568 = vrot.slane %v1563, %v1567
        %v1570 = vmul.f32 %v1555, %v1568
        %v1571 = vmul.f32 %v1558, %v1568
        %v1572 = vld [vmem:[%s14] sm:$0x1]
        %v1574 = vlaneseq
        %v1575 = vshrl.u32 %v1574, 7
        %v1576 = vsub.s32 0, %v1575
        %v1577 = vrot.slane %v1572, %v1576
        %v1579 = vmul.f32 %v1199, %v1577
        %v1580 = vmul.f32 %v1202, %v1577
        %v1581 = vadd.f32 %v1570, %v1579
        %v1582 = vadd.f32 %v1571, %v1580
        %1583 = vst [vmem:[%s842] sm:$0xff] %v1581
        %1584 = vst [vmem:[%s842 + $0x8] sm:$0xff] %v1582
        %s1585 = sand.u32 %s422, 1
        %s1586 = scalar_lea.sflag [#allocation4], %s1585
        %s1587 = sand.u32 %s422, 1
        %s1588 = smul.addr %s1587, 8
        %s1589 = scalar_lea.vmem [#allocation16], %s1588
        %s1590 = sand.u32 %s50, 1
        %s1591 = scalar_lea.sflag [#allocation18], %s1590
        %s1592 = sand.u32 %s450, 1
        %s1593 = smul.addr %s1592, 16
        %s1594 = scalar_lea.vmem [#allocation17], %s1593
        %s1595 = sand.u32 %s50, 1
        %s1596 = scalar_lea.sflag [#allocation18], %s1595
        %s1597 = sand.u32 %s478, 1
        %s1598 = smul.addr %s1597, 8
        %s1599 = scalar_lea.vmem [#allocation19], %s1598
        %s1600 = sand.u32 %s50, 1
        %s1601 = scalar_lea.sflag [#allocation21], %s1600
        %s1602 = sand.u32 %s506, 1
        %s1603 = smul.addr %s1602, 16
        %s1604 = scalar_lea.vmem [#allocation20], %s1603
        %s1605 = sand.u32 %s50, 1
        %s1606 = scalar_lea.sflag [#allocation21], %s1605
        %s1607 = sand.u32 %s534, 1
        %s1608 = smul.addr %s1607, 16
        %s1609 = scalar_lea.vmem [#allocation22], %s1608
        // Predicated region
        $region117: #{tpu_custom_call.1} parent=83 // pred_check
          %p1610 = pneg %p432
        $region118: #{tpu_custom_call.1} parent=83 // pred_check_branch
          %1612 = sbr.rel (%p1610) target = $region120
        $region119: #{tpu_custom_call.1} parent=83 // pred_region
          %s1613 = smul.u32 2, %s55
          %s1615 = ssub.s32 128, 128
          %1616 = vsyncadd %s1586, %s1615
          %s1617 = smul.addr %s54, 2
          %s1618 = sadd.s32 %s1613, %s1617
          %s1619 = smul.addr %s1618, 64
          %s1620 = scalar_lea.hbm %s16, %s1619
          %s1621 = sshll.u32 %s1589, 4
          %s1622 = int_to_ptr.vmem [resolvable:$true] %s1621
          %1627 = dma.vmem_to_hbm [thread:$0]  %s1622, 128, %s1620, %s1586, 64, 64, 4
        $region120: #{tpu_custom_call.1} parent=83 // pred_fallthru
          _
        // Predicated region
        $region121: #{tpu_custom_call.1} parent=83 // pred_check
          %p1628 = pneg %p460
        $region122: #{tpu_custom_call.1} parent=83 // pred_check_branch
          %1630 = sbr.rel (%p1628) target = $region124
        $region123: #{tpu_custom_call.1} parent=83 // pred_region
          %s1631 = smul.u32 2, %s55
          %s1633 = ssub.s32 256, 256
          %1634 = vsyncadd %s1591, %s1633
          %s1635 = smul.addr %s54, 2
          %s1636 = sadd.s32 %s1631, %s1635
          %s1637 = smul.addr %s1636, 128
          %s1638 = scalar_lea.hbm %s17, %s1637
          %s1639 = sshll.u32 %s1594, 4
          %s1640 = int_to_ptr.vmem [resolvable:$true] %s1639
          %1645 = dma.vmem_to_hbm [thread:$0]  %s1640, 256, %s1638, %s1591, 128, 128, 8
        $region124: #{tpu_custom_call.1} parent=83 // pred_fallthru
          _
        // Predicated region
        $region125: #{tpu_custom_call.1} parent=83 // pred_check
          %p1646 = pneg %p488
        $region126: #{tpu_custom_call.1} parent=83 // pred_check_branch
          %1648 = sbr.rel (%p1646) target = $region128
        $region127: #{tpu_custom_call.1} parent=83 // pred_region
          %s1649 = smul.u32 2, %s55
          %s1651 = ssub.s32 128, 128
          %1652 = vsyncadd %s1596, %s1651
          %s1653 = smul.addr %s54, 2
          %s1654 = sadd.s32 %s1649, %s1653
          %s1655 = smul.addr %s1654, 64
          %s1656 = scalar_lea.hbm %s18, %s1655
          %s1657 = sshll.u32 %s1599, 4
          %s1658 = int_to_ptr.vmem [resolvable:$true] %s1657
          %1663 = dma.vmem_to_hbm [thread:$0]  %s1658, 128, %s1656, %s1596, 64, 64, 4
        $region128: #{tpu_custom_call.1} parent=83 // pred_fallthru
          _
        // Predicated region
        $region129: #{tpu_custom_call.1} parent=83 // pred_check
          %p1664 = pneg %p516
        $region130: #{tpu_custom_call.1} parent=83 // pred_check_branch
          %1666 = sbr.rel (%p1664) target = $region132
        $region131: #{tpu_custom_call.1} parent=83 // pred_region
          %s1667 = smul.u32 2, %s55
          %s1669 = ssub.s32 256, 256
          %1670 = vsyncadd %s1601, %s1669
          %s1671 = smul.addr %s54, 2
          %s1672 = sadd.s32 %s1667, %s1671
          %s1673 = smul.addr %s1672, 128
          %s1674 = scalar_lea.hbm %s19, %s1673
          %s1675 = sshll.u32 %s1604, 4
          %s1676 = int_to_ptr.vmem [resolvable:$true] %s1675
          %1681 = dma.vmem_to_hbm [thread:$0]  %s1676, 256, %s1674, %s1601, 128, 128, 8
        $region132: #{tpu_custom_call.1} parent=83 // pred_fallthru
          _
        // Predicated region
        $region133: #{tpu_custom_call.1} parent=83 // pred_check
          %p1682 = pneg %p544
        $region134: #{tpu_custom_call.1} parent=83 // pred_check_branch
          %1684 = sbr.rel (%p1682) target = $region136
        $region135: #{tpu_custom_call.1} parent=83 // pred_region
          %s1685 = smul.u32 2, %s55
          %s1687 = ssub.s32 256, 256
          %1688 = vsyncadd %s1606, %s1687
          %s1689 = smul.addr %s54, 2
          %s1690 = sadd.s32 %s1685, %s1689
          %s1691 = smul.addr %s1690, 128
          %s1692 = scalar_lea.hbm %s20, %s1691
          %s1693 = sshll.u32 %s1609, 4
          %s1694 = int_to_ptr.vmem [resolvable:$true] %s1693
          %1699 = dma.vmem_to_hbm [thread:$0]  %s1694, 256, %s1692, %s1606, 128, 128, 8
        $region136: #{tpu_custom_call.1} parent=83 // pred_fallthru
          _
      $region84: #{tpu_custom_call.1} parent=5 // pred_fallthru
        _
      %p1700 = scmp.le.s32.totalorder 2, %s45
      // Predicated region
      $region137: #{tpu_custom_call.1} parent=5 // pred_check
        %p1701 = pneg %p1700
      $region138: #{tpu_custom_call.1} parent=5 // pred_check_branch
        %1703 = sbr.rel (%p1701) target = $region140
      $region139: #{tpu_custom_call.1} parent=5 // pred_region
        %s1704 = ssub.s32 %s45, 2
        // Predicated region
        $region141: #{tpu_custom_call.1} parent=139 // pred_check
          %p1705 = pneg %p438
        $region142: #{tpu_custom_call.1} parent=139 // pred_check_branch
          %1707 = sbr.rel (%p1705) target = $region144
        $region143: #{tpu_custom_call.1} parent=139 // pred_region
          %s1708 = sand.u32 %s423, 1
          %s1709 = scalar_lea.sflag [#allocation4], %s1708
          %s1710 = sand.u32 %s423, 1
          %s1711 = smul.addr %s1710, 8
          %s1712 = scalar_lea.vmem [#allocation16], %s1711
          %1713 = dma.done %s1709, 128
        $region144: #{tpu_custom_call.1} parent=139 // pred_fallthru
          _
        // Predicated region
        $region145: #{tpu_custom_call.1} parent=139 // pred_check
          %p1714 = pneg %p466
        $region146: #{tpu_custom_call.1} parent=139 // pred_check_branch
          %1716 = sbr.rel (%p1714) target = $region148
        $region147: #{tpu_custom_call.1} parent=139 // pred_region
          %s1717 = sand.u32 %s51, 1
          %s1718 = scalar_lea.sflag [#allocation18], %s1717
          %s1719 = sand.u32 %s451, 1
          %s1720 = smul.addr %s1719, 16
          %s1721 = scalar_lea.vmem [#allocation17], %s1720
          %1722 = dma.done %s1718, 256
        $region148: #{tpu_custom_call.1} parent=139 // pred_fallthru
          _
        // Predicated region
        $region149: #{tpu_custom_call.1} parent=139 // pred_check
          %p1723 = pneg %p494
        $region150: #{tpu_custom_call.1} parent=139 // pred_check_branch
          %1725 = sbr.rel (%p1723) target = $region152
        $region151: #{tpu_custom_call.1} parent=139 // pred_region
          %s1726 = sand.u32 %s51, 1
          %s1727 = scalar_lea.sflag [#allocation18], %s1726
          %s1728 = sand.u32 %s479, 1
          %s1729 = smul.addr %s1728, 8
          %s1730 = scalar_lea.vmem [#allocation19], %s1729
          %1731 = dma.done %s1727, 128
        $region152: #{tpu_custom_call.1} parent=139 // pred_fallthru
          _
        // Predicated region
        $region153: #{tpu_custom_call.1} parent=139 // pred_check
          %p1732 = pneg %p522
        $region154: #{tpu_custom_call.1} parent=139 // pred_check_branch
          %1734 = sbr.rel (%p1732) target = $region156
        $region155: #{tpu_custom_call.1} parent=139 // pred_region
          %s1735 = sand.u32 %s51, 1
          %s1736 = scalar_lea.sflag [#allocation21], %s1735
          %s1737 = sand.u32 %s507, 1
          %s1738 = smul.addr %s1737, 16
          %s1739 = scalar_lea.vmem [#allocation20], %s1738
          %1740 = dma.done %s1736, 256
        $region156: #{tpu_custom_call.1} parent=139 // pred_fallthru
          _
        // Predicated region
        $region157: #{tpu_custom_call.1} parent=139 // pred_check
          %p1741 = pneg %p550
        $region158: #{tpu_custom_call.1} parent=139 // pred_check_branch
          %1743 = sbr.rel (%p1741) target = $region160
        $region159: #{tpu_custom_call.1} parent=139 // pred_region
          %s1744 = sand.u32 %s51, 1
          %s1745 = scalar_lea.sflag [#allocation21], %s1744
          %s1746 = sand.u32 %s535, 1
          %s1747 = smul.addr %s1746, 16
          %s1748 = scalar_lea.vmem [#allocation22], %s1747
          %1749 = dma.done %s1745, 256
        $region160: #{tpu_custom_call.1} parent=139 // pred_fallthru
          _
      $region140: #{tpu_custom_call.1} parent=5 // pred_fallthru
        _
    $region6: #{tpu_custom_call.1} parent=1 // loop_footer
      %s49 = sadd.s32 1, %s45
    $region7: #{tpu_custom_call.1} parent=1 // loop_footer_branch
      %44 = sbr.rel target = $region3
    $region8: #{tpu_custom_call.1} parent=1 // loop_exit
      _
    %1750 = vsyncpa [#allocation3], 1
    %s1751 = scalar_lea.sflag [#allocation3], 1
    %1752 = vsyncpa %s1751, 1
    %1753 = vsyncpa [#allocation6], 1
    %s1754 = scalar_lea.sflag [#allocation6], 1
    %1755 = vsyncpa %s1754, 1
    %1756 = vsyncpa [#allocation9], 1
    %1757 = vsyncpa [#allocation12], 1
    %1758 = vsyncpa [#allocation15], 1
    %1759 = vsyncpa [#allocation4], 1
    %s1760 = scalar_lea.sflag [#allocation4], 1
    %1761 = vsyncpa %s1760, 1
    %1762 = vsyncpa [#allocation18], 1
    %s1763 = scalar_lea.sflag [#allocation18], 1
    %1764 = vsyncpa %s1763, 1
    %1765 = vsyncpa [#allocation21], 1
    %s1766 = scalar_lea.sflag [#allocation21], 1
    %1767 = vsyncpa %s1766, 1

</llo_original>
